<compile_context>
chip_gen: v7x
topology: tpu7x:2x2x1
jax: 0.10.0
libtpu: 0.0.40
codegen_flags: <defaults>
</compile_context>

<pallas_src>
import jax
import jax.numpy as jnp
import numpy as np
from jax.experimental import pallas as pl
from jax.experimental.pallas import tpu as pltpu

LANE = 128


# ------------------------------ small helpers -------------------------------

def _round_up(x, m):
    return (x + m - 1) // m * m


def _pad_last(a, n):
    pad = n - a.shape[-1]
    if pad == 0:
        return a
    cfg = [(0, 0)] * (a.ndim - 1) + [(0, pad)]
    return jnp.pad(a, cfg)


def _pad_dim(a, axis, n):
    pad = n - a.shape[axis]
    if pad == 0:
        return a
    cfg = [(0, 0)] * a.ndim
    cfg[axis] = (0, pad)
    return jnp.pad(a, cfg)


def _phase_decompose(xp, sh, sw, hph, wph):
    """xp: (B, Hp, Wp, C) zero-padded.  Returns (B, sh*sw, hph, wph, C) with
    phase[p*sw+q][j, i] = xp[sh*j + p, sw*i + q]  (space-to-depth)."""
    B, Hp, Wp, C = xp.shape
    phases = []
    for p in range(sh):
        for q in range(sw):
            sl = jax.lax.slice(
                xp, (0, p, q, 0),
                (B, p + sh * (hph - 1) + 1, q + sw * (wph - 1) + 1, C),
                (1, sh, sw, 1))
            phases.append(sl)
    return jnp.stack(phases, axis=1)


def _pick_row_tile(Ho, Wo, wph, np_phases, cin, gp, coutp, dy_max,
                   budget_bytes=8 << 20):
    """Largest divisor of Ho whose per-step VMEM footprint fits the budget
    (keeps v7x's 64 MiB happy while staying deep enough to pipeline)."""
    per_row = 4 * (2 * np_phases * wph * cin      # phase input (double-buffered)
                   + np_phases * wph * gp         # stage-1 activations
                   + Wo * gp                      # depthwise accumulator
                   + 2 * Wo * coutp)              # output (double-buffered)
    best = Ho
    for cand in range(Ho, 0, -1):
        if Ho % cand:
            continue
        if cand == Ho or (cand * Wo) % 8 == 0:
            best = cand
            if (cand + dy_max) * per_row <= budget_bytes:
                return cand
    return best


# ------------------------------- fused kernel -------------------------------

def _build_kernel(*, cin, gp, kh, kw, sh, sw, toh, wo, thph, wph,
                  np_phases, residual):
    def kernel(ph_ref, msk_ref, w1_ref, b0_ref, a0_ref, wdw_ref, b1_ref,
               a1_ref, wp_ref, b2_ref, *rest):
        if residual:
            res_ref, o_ref = rest
        else:
            (o_ref,) = rest

        b0 = b0_ref[...]
        a0 = a0_ref[...]

        # ---- Stage 1: 1x1 conv (BN scale folded into w1) + bias + PReLU,
        #      computed per spatial phase; mask zeroes the dw-conv zero-pad ring.
        ys = []
        for p in range(np_phases):
            xv = ph_ref[p].astype(jnp.float32)              # (thph, wph, cin)
            if cin <= 32:
                # tiny contraction: unrolled VPU broadcast-MAC (skip the MXU)
                acc = xv[:, :, 0:1] * w1_ref[0:1, :]
                for c in range(1, cin):
                    acc = acc + xv[:, :, c:c + 1] * w1_ref[c:c + 1, :]
            else:
                acc = jnp.dot(xv.reshape(thph * wph, cin), w1_ref[...],
                              preferred_element_type=jnp.float32
                              ).reshape(thph, wph, gp)
            y = acc + b0
            y = jnp.where(y > 0, y, y * a0)
            y = y * msk_ref[p]
            ys.append(y)

        # ---- Stage 2: depthwise kh x kw stride-(sh,sw) conv as kh*kw shifted
        #      slice MACs (BN scale folded into wdw) + bias + PReLU.
        acc2 = None
        for ky in range(kh):
            for kx in range(kw):
                p = (ky % sh) * sw + (kx % sw)
                dy, dx = ky // sh, kx // sw
                tap = ys[p][dy:dy + toh, dx:dx + wo, :]
                idx = ky * kw + kx
                term = tap * wdw_ref[idx:idx + 1, :]
                acc2 = term if acc2 is None else acc2 + term
        z = acc2 + b1_ref[...]
        z = jnp.where(z > 0, z, z * a1_ref[...])

        # ---- Stage 3: 1x1 projection (BN scale folded into wp) + bias
        #      (lane-dense 128x128 MXU matmul) + fused residual.
        out = jnp.dot(z.reshape(toh * wo, gp), wp_ref[...],
                      preferred_element_type=jnp.float32) + b2_ref[...]
        if residual:
            out = out + res_ref[...].astype(jnp.float32)
        o_ref[...] = out.astype(o_ref.dtype)

    return kernel


# --------------------------------- wrapper ----------------------------------

def depth_wise_forward(x_nchw, params, *, kernel=(3, 3), stride=(2, 2),
                       padding=(1, 1), residual=False, row_tile=None,
                       vmem_limit_bytes=48 * 1024 * 1024):
    N, cin, H, W = x_nchw.shape
    G = params["w1"].shape[1]
    cout = params["wp"].shape[1]
    kh, kw = kernel
    sh, sw = stride
    pph, ppw = padding

    Ho = (H + 2 * pph - kh) // sh + 1
    Wo = (W + 2 * ppw - kw) // sw + 1
    dy_max = (kh - 1) // sh
    dx_max = (kw - 1) // sw
    hph = Ho + dy_max
    wph = Wo + dx_max
    np_phases = sh * sw

    gp = _round_up(G, LANE)
    coutp = _round_up(cout, LANE)

    if residual:
        assert stride == (1, 1) and cout == cin and Ho == H and Wo == W, \
            "residual requires stride (1,1) and out_c == in_c"

    # output-row tile (halo of dy_max rows baked into each tile)
    if row_tile is None:
        row_tile = _pick_row_tile(Ho, Wo, wph, np_phases, cin, gp, coutp, dy_max)
    toh = row_tile
    assert Ho % toh == 0 and (toh == Ho or (toh * Wo) % 8 == 0), (Ho, toh, Wo)
    nt = Ho // toh
    thph = toh + dy_max

    # ---- layout plumbing (plain JAX): NCHW->NHWC, zero-pad, phase-decompose,
    #      cut row tiles.  Extra HBM traffic ~= one padded copy of x.
    x = jnp.transpose(x_nchw, (0, 2, 3, 1))                          # (N,H,W,Cin)
    xp = jnp.pad(x, ((0, 0), (pph, pph), (ppw, ppw), (0, 0)))
    phases = _phase_decompose(xp, sh, sw, hph, wph)                  # (N,NP,hph,wph,Cin)
    ph_tiled = jnp.stack([phases[:, :, t * toh:t * toh + thph]
                          for t in range(nt)], axis=1)
    ph_tiled = ph_tiled.reshape(N * nt, np_phases, thph, wph, cin)

    # mask that zeroes stage-1 output on the depthwise conv's zero-padding ring
    ones = jnp.pad(jnp.ones((1, H, W, 1), jnp.float32),
                   ((0, 0), (pph, pph), (ppw, ppw), (0, 0)))
    msk = _phase_decompose(ones, sh, sw, hph, wph)                   # (1,NP,hph,wph,1)
    msk_tiled = jnp.stack([msk[0, :, t * toh:t * toh + thph]
                           for t in range(nt)], axis=0)              # (nt,NP,thph,wph,1)

    # ---- fold BN scales into weights, pad channel dims to lane width (128)
    w1s = _pad_last(params["w1"] * params["s0"], gp)                 # (Cin, gp)
    b0 = _pad_last(params["b0"], gp)
    a0 = _pad_last(params["a0"], gp)
    wdws = _pad_last(params["wdw"].reshape(kh * kw, G) * params["s1"], gp)
    b1 = _pad_last(params["b1"], gp)
    a1 = _pad_last(params["a1"], gp)
    wps = _pad_last(_pad_dim(params["wp"] * params["s2"], 0, gp), coutp)
    b2 = _pad_last(params["b2"], coutp)

    kern = _build_kernel(cin=cin, gp=gp, kh=kh, kw=kw, sh=sh, sw=sw, toh=toh,
                         wo=Wo, thph=thph, wph=wph, np_phases=np_phases,
                         residual=residual)

    in_specs = [
        pl.BlockSpec((None, np_phases, thph, wph, cin),
                     lambda n, t: (n * nt + t, 0, 0, 0, 0)),
        pl.BlockSpec((None, np_phases, thph, wph, 1),
                     lambda n, t: (t, 0, 0, 0, 0)),
        pl.BlockSpec((cin, gp), lambda n, t: (0, 0)),
        pl.BlockSpec((1, gp), lambda n, t: (0, 0)),
        pl.BlockSpec((1, gp), lambda n, t: (0, 0)),
        pl.BlockSpec((kh * kw, gp), lambda n, t: (0, 0)),
        pl.BlockSpec((1, gp), lambda n, t: (0, 0)),
        pl.BlockSpec((1, gp), lambda n, t: (0, 0)),
        pl.BlockSpec((gp, coutp), lambda n, t: (0, 0)),
        pl.BlockSpec((1, coutp), lambda n, t: (0, 0)),
    ]
    args = [ph_tiled, msk_tiled, w1s, b0, a0, wdws, b1, a1, wps, b2]

    if residual:
        xres = _pad_last(x.reshape(N, H * W, cin), coutp)            # (N,Ho*Wo,coutp)
        in_specs.append(pl.BlockSpec((None, toh * Wo, coutp),
                                     lambda n, t: (n, t, 0)))
        args.append(xres)

    out = pl.pallas_call(
        kern,
        grid=(N, nt),
        in_specs=in_specs,
        out_specs=pl.BlockSpec((None, toh * Wo, coutp), lambda n, t: (n, t, 0)),
        out_shape=jax.ShapeDtypeStruct((N, Ho * Wo, coutp), jnp.float32),
        compiler_params=pltpu.CompilerParams(
            dimension_semantics=("parallel", "parallel"),
            vmem_limit_bytes=vmem_limit_bytes),
    )(*args)

    # drop lane padding, back to NCHW
    return out[:, :, :cout].reshape(N, Ho, Wo, cout).transpose(0, 3, 1, 2)


# ------------------------- deterministic parameters --------------------------

def init_params(key, in_c, out_c, groups):
    keys = jax.random.split(key, 8)
    eps = 1e-5

    def bn_fold(k, c):
        k1, k2, k3, k4 = jax.random.split(k, 4)
        gamma = 1.0 + 0.1 * jax.random.normal(k1, (c,), jnp.float32)
        beta = 0.1 * jax.random.normal(k2, (c,), jnp.float32)
        mean = 0.1 * jax.random.normal(k3, (c,), jnp.float32)
        var = 0.5 + jnp.abs(jax.random.normal(k4, (c,), jnp.float32))
        scale = gamma / jnp.sqrt(var + eps)
        bias = beta - mean * scale
        return scale.reshape(1, c), bias.reshape(1, c)

    w1 = 0.3 * jax.random.normal(keys[0], (in_c, groups), jnp.float32)
    wdw = 0.3 * jax.random.normal(keys[1], (3, 3, groups), jnp.float32)
    wp = 0.3 * jax.random.normal(keys[2], (groups, out_c), jnp.float32)
    s0, b0 = bn_fold(keys[3], groups)
    s1, b1 = bn_fold(keys[4], groups)
    s2, b2 = bn_fold(keys[5], out_c)
    a0 = 0.25 + 0.05 * jax.random.normal(keys[6], (1, groups), jnp.float32)
    a1 = 0.25 + 0.05 * jax.random.normal(keys[7], (1, groups), jnp.float32)
    return dict(w1=w1, wdw=wdw, wp=wp, s0=s0, b0=b0, a0=a0,
                s1=s1, b1=b1, a1=a1, s2=s2, b2=b2)


# --------------------------- plain-JAX reference -----------------------------

def reference_xla(x_nchw, params, stride=(2, 2), padding=(1, 1)):
    G = params["w1"].shape[1]
    w1 = jnp.transpose(params["w1"], (1, 0))[:, :, None, None]       # (G,Cin,1,1)
    wdw = jnp.transpose(params["wdw"], (2, 0, 1))[:, None]           # (G,1,3,3)
    wp = jnp.transpose(params["wp"], (1, 0))[:, :, None, None]       # (Cout,G,1,1)
    dn = ('NCHW', 'OIHW', 'NCHW')

    def bn(y, s, b):
        return y * s[0][None, :, None, None] + b[0][None, :, None, None]

    def prelu(y, a):
        return jnp.where(y > 0, y, y * a[0][None, :, None, None])

    y = jax.lax.conv_general_dilated(x_nchw, w1, (1, 1), 'VALID',
                                     dimension_numbers=dn)
    y = prelu(bn(y, params["s0"], params["b0"]), params["a0"])
    y = jax.lax.conv_general_dilated(
        y, wdw, stride, ((padding[0],) * 2, (padding[1],) * 2),
        dimension_numbers=dn, feature_group_count=G)
    y = prelu(bn(y, params["s1"], params["b1"]), params["a1"])
    y = jax.lax.conv_general_dilated(y, wp, (1, 1), 'VALID',
                                     dimension_numbers=dn)
    y = bn(y, params["s2"], params["b2"])
    return y


# ----------------------------------- main ------------------------------------

if __name__ == "__main__":
    key = jax.random.PRNGKey(0)
    k1, k2, k3, k4 = jax.random.split(key, 4)

    # Depth_Wise(4 -> 8, groups=8, kernel 3x3, stride 2, pad 1)  (downsampling use)
    in_c, out_c, groups = 4, 8, 8
    N, H, W = 2, 16, 16
    params = init_params(k1, in_c, out_c, groups)
    x = jax.random.normal(k2, (N, in_c, H, W), jnp.float32)

    out = jax.block_until_ready(depth_wise_forward(x, params, row_tile=4))
    assert out.shape == (N, out_c, H // 2, W // 2), out.shape
    ref = jax.block_until_ready(reference_xla(x, params))
    np.testing.assert_allclose(np.asarray(out), np.asarray(ref),
                               rtol=5e-2, atol=5e-2)

    # Residual variant (stride 1, out_c == in_c), as used inside Residual(...)
    in_c2 = out_c2 = groups2 = 8
    N2, H2, W2 = 2, 8, 8
    params2 = init_params(k3, in_c2, out_c2, groups2)
    x2 = jax.random.normal(k4, (N2, in_c2, H2, W2), jnp.float32)

    out2 = jax.block_until_ready(
        depth_wise_forward(x2, params2, stride=(1, 1), padding=(1, 1),
                           residual=True))
    ref2 = jax.block_until_ready(
        reference_xla(x2, params2, stride=(1, 1), padding=(1, 1)) + x2)
    np.testing.assert_allclose(np.asarray(out2), np.asarray(ref2),
                               rtol=5e-2, atol=5e-2)

    print("KERNEL_OK")
</pallas_src>

<mosaic_0001>
module attributes {stable_mosaic.version = 11 : i64} {
  func.func @kernel(%arg0: i32, %arg1: i32, %arg2: memref<1x4x5x9x4xf32, #tpu.memory_space<vmem>>, %arg3: memref<1x4x5x9x1xf32, #tpu.memory_space<vmem>>, %arg4: memref<4x128xf32, #tpu.memory_space<vmem>>, %arg5: memref<1x128xf32, #tpu.memory_space<vmem>>, %arg6: memref<1x128xf32, #tpu.memory_space<vmem>>, %arg7: memref<9x128xf32, #tpu.memory_space<vmem>>, %arg8: memref<1x128xf32, #tpu.memory_space<vmem>>, %arg9: memref<1x128xf32, #tpu.memory_space<vmem>>, %arg10: memref<128x128xf32, #tpu.memory_space<vmem>>, %arg11: memref<1x128xf32, #tpu.memory_space<vmem>>, %arg12: memref<1x32x128xf32, #tpu.memory_space<vmem>>) attributes {dimension_semantics = [#tpu.dimension_semantics<parallel>, #tpu.dimension_semantics<parallel>], iteration_bounds = array<i64: 2, 2>, scalar_prefetch = 0 : i64, scratch_operands = 0 : i64, tpu.core_type = #tpu.core_type<tc>, window_params = [{transform_indices = @transform_0, window_bounds = array<i64: 1, 4, 5, 9, 4>}, {transform_indices = @transform_1, window_bounds = array<i64: 1, 4, 5, 9, 1>}, {pipeline_mode = #tpu.pipeline_mode<synchronous>, transform_indices = @transform_2, window_bounds = array<i64: 4, 128>}, {pipeline_mode = #tpu.pipeline_mode<synchronous>, transform_indices = @transform_3, window_bounds = array<i64: 1, 128>}, {pipeline_mode = #tpu.pipeline_mode<synchronous>, transform_indices = @transform_4, window_bounds = array<i64: 1, 128>}, {pipeline_mode = #tpu.pipeline_mode<synchronous>, transform_indices = @transform_5, window_bounds = array<i64: 9, 128>}, {pipeline_mode = #tpu.pipeline_mode<synchronous>, transform_indices = @transform_6, window_bounds = array<i64: 1, 128>}, {pipeline_mode = #tpu.pipeline_mode<synchronous>, transform_indices = @transform_7, window_bounds = array<i64: 1, 128>}, {pipeline_mode = #tpu.pipeline_mode<synchronous>, transform_indices = @transform_8, window_bounds = array<i64: 128, 128>}, {pipeline_mode = #tpu.pipeline_mode<synchronous>, transform_indices = @transform_9, window_bounds = array<i64: 1, 128>}, {transform_indices = @transform_10, window_bounds = array<i64: 1, 32, 128>}]} {
    %c0 = arith.constant 0 : index
    %c0_0 = arith.constant 0 : index
    %0 = vector.load %arg5[%c0, %c0_0] : memref<1x128xf32, #tpu.memory_space<vmem>>, vector<1x128xf32>
    %c0_1 = arith.constant 0 : index
    %c0_2 = arith.constant 0 : index
    %1 = vector.load %arg6[%c0_1, %c0_2] : memref<1x128xf32, #tpu.memory_space<vmem>>, vector<1x128xf32>
    %c0_3 = arith.constant 0 : index
    %c0_4 = arith.constant 0 : index
    %c0_5 = arith.constant 0 : index
    %c0_6 = arith.constant 0 : index
    %c0_7 = arith.constant 0 : index
    %2 = vector.load %arg2[%c0_3, %c0_4, %c0_5, %c0_6, %c0_7] : memref<1x4x5x9x4xf32, #tpu.memory_space<vmem>>, vector<1x1x5x9x4xf32>
    %3 = vector.shape_cast %2 : vector<1x1x5x9x4xf32> to vector<5x9x4xf32>
    %4 = vector.extract_strided_slice %3 {offsets = [0, 0, 0], sizes = [5, 9, 1], strides = [1, 1, 1]} : vector<5x9x4xf32> to vector<5x9x1xf32>
    %c0_8 = arith.constant 0 : index
    %c0_9 = arith.constant 0 : index
    %5 = vector.load %arg4[%c0_8, %c0_9] : memref<4x128xf32, #tpu.memory_space<vmem>>, vector<1x128xf32>
    %6 = vector.shape_cast %5 : vector<1x128xf32> to vector<1x1x128xf32>
    %7 = vector.broadcast %4 : vector<5x9x1xf32> to vector<5x9x128xf32>
    %8 = vector.broadcast %6 : vector<1x1x128xf32> to vector<5x9x128xf32>
    %9 = arith.mulf %7, %8 : vector<5x9x128xf32>
    %10 = vector.extract_strided_slice %3 {offsets = [0, 0, 1], sizes = [5, 9, 1], strides = [1, 1, 1]} : vector<5x9x4xf32> to vector<5x9x1xf32>
    %c1 = arith.constant 1 : index
    %c0_10 = arith.constant 0 : index
    %11 = vector.load %arg4[%c1, %c0_10] : memref<4x128xf32, #tpu.memory_space<vmem>>, vector<1x128xf32>
    %12 = vector.shape_cast %11 : vector<1x128xf32> to vector<1x1x128xf32>
    %13 = vector.broadcast %10 : vector<5x9x1xf32> to vector<5x9x128xf32>
    %14 = vector.broadcast %12 : vector<1x1x128xf32> to vector<5x9x128xf32>
    %15 = arith.mulf %13, %14 : vector<5x9x128xf32>
    %16 = arith.addf %9, %15 : vector<5x9x128xf32>
    %17 = vector.extract_strided_slice %3 {offsets = [0, 0, 2], sizes = [5, 9, 1], strides = [1, 1, 1]} : vector<5x9x4xf32> to vector<5x9x1xf32>
    %c2 = arith.constant 2 : index
    %c0_11 = arith.constant 0 : index
    %18 = vector.load %arg4[%c2, %c0_11] : memref<4x128xf32, #tpu.memory_space<vmem>>, vector<1x128xf32>
    %19 = vector.shape_cast %18 : vector<1x128xf32> to vector<1x1x128xf32>
    %20 = vector.broadcast %17 : vector<5x9x1xf32> to vector<5x9x128xf32>
    %21 = vector.broadcast %19 : vector<1x1x128xf32> to vector<5x9x128xf32>
    %22 = arith.mulf %20, %21 : vector<5x9x128xf32>
    %23 = arith.addf %16, %22 : vector<5x9x128xf32>
    %24 = vector.extract_strided_slice %3 {offsets = [0, 0, 3], sizes = [5, 9, 1], strides = [1, 1, 1]} : vector<5x9x4xf32> to vector<5x9x1xf32>
    %c3 = arith.constant 3 : index
    %c0_12 = arith.constant 0 : index
    %25 = vector.load %arg4[%c3, %c0_12] : memref<4x128xf32, #tpu.memory_space<vmem>>, vector<1x128xf32>
    %26 = vector.shape_cast %25 : vector<1x128xf32> to vector<1x1x128xf32>
    %27 = vector.broadcast %24 : vector<5x9x1xf32> to vector<5x9x128xf32>
    %28 = vector.broadcast %26 : vector<1x1x128xf32> to vector<5x9x128xf32>
    %29 = arith.mulf %27, %28 : vector<5x9x128xf32>
    %30 = arith.addf %23, %29 : vector<5x9x128xf32>
    %31 = vector.shape_cast %0 : vector<1x128xf32> to vector<1x1x128xf32>
    %32 = vector.broadcast %31 : vector<1x1x128xf32> to vector<5x9x128xf32>
    %33 = arith.addf %30, %32 : vector<5x9x128xf32>
    %cst = arith.constant 0.000000e+00 : f32
    %34 = vector.broadcast %cst : f32 to vector<5x9x128xf32>
    %35 = arith.cmpf ogt, %33, %34 : vector<5x9x128xf32>
    %36 = vector.shape_cast %1 : vector<1x128xf32> to vector<1x1x128xf32>
    %37 = vector.broadcast %36 : vector<1x1x128xf32> to vector<5x9x128xf32>
    %38 = arith.mulf %33, %37 : vector<5x9x128xf32>
    %39 = arith.select %35, %33, %38 : vector<5x9x128xi1>, vector<5x9x128xf32>
    %c0_13 = arith.constant 0 : index
    %c0_14 = arith.constant 0 : index
    %c0_15 = arith.constant 0 : index
    %c0_16 = arith.constant 0 : index
    %c0_17 = arith.constant 0 : index
    %40 = vector.load %arg3[%c0_13, %c0_14, %c0_15, %c0_16, %c0_17] : memref<1x4x5x9x1xf32, #tpu.memory_space<vmem>>, vector<1x1x5x9x1xf32>
    %41 = vector.shape_cast %40 : vector<1x1x5x9x1xf32> to vector<5x9x1xf32>
    %42 = vector.broadcast %41 : vector<5x9x1xf32> to vector<5x9x128xf32>
    %43 = arith.mulf %39, %42 : vector<5x9x128xf32>
    %c0_18 = arith.constant 0 : index
    %c1_19 = arith.constant 1 : index
    %c0_20 = arith.constant 0 : index
    %c0_21 = arith.constant 0 : index
    %c0_22 = arith.constant 0 : index
    %44 = vector.load %arg2[%c0_18, %c1_19, %c0_20, %c0_21, %c0_22] : memref<1x4x5x9x4xf32, #tpu.memory_space<vmem>>, vector<1x1x5x9x4xf32>
    %45 = vector.shape_cast %44 : vector<1x1x5x9x4xf32> to vector<5x9x4xf32>
    %46 = vector.extract_strided_slice %45 {offsets = [0, 0, 0], sizes = [5, 9, 1], strides = [1, 1, 1]} : vector<5x9x4xf32> to vector<5x9x1xf32>
    %c0_23 = arith.constant 0 : index
    %c0_24 = arith.constant 0 : index
    %47 = vector.load %arg4[%c0_23, %c0_24] : memref<4x128xf32, #tpu.memory_space<vmem>>, vector<1x128xf32>
    %48 = vector.shape_cast %47 : vector<1x128xf32> to vector<1x1x128xf32>
    %49 = vector.broadcast %46 : vector<5x9x1xf32> to vector<5x9x128xf32>
    %50 = vector.broadcast %48 : vector<1x1x128xf32> to vector<5x9x128xf32>
    %51 = arith.mulf %49, %50 : vector<5x9x128xf32>
    %52 = vector.extract_strided_slice %45 {offsets = [0, 0, 1], sizes = [5, 9, 1], strides = [1, 1, 1]} : vector<5x9x4xf32> to vector<5x9x1xf32>
    %c1_25 = arith.constant 1 : index
    %c0_26 = arith.constant 0 : index
    %53 = vector.load %arg4[%c1_25, %c0_26] : memref<4x128xf32, #tpu.memory_space<vmem>>, vector<1x128xf32>
    %54 = vector.shape_cast %53 : vector<1x128xf32> to vector<1x1x128xf32>
    %55 = vector.broadcast %52 : vector<5x9x1xf32> to vector<5x9x128xf32>
    %56 = vector.broadcast %54 : vector<1x1x128xf32> to vector<5x9x128xf32>
    %57 = arith.mulf %55, %56 : vector<5x9x128xf32>
    %58 = arith.addf %51, %57 : vector<5x9x128xf32>
    %59 = vector.extract_strided_slice %45 {offsets = [0, 0, 2], sizes = [5, 9, 1], strides = [1, 1, 1]} : vector<5x9x4xf32> to vector<5x9x1xf32>
    %c2_27 = arith.constant 2 : index
    %c0_28 = arith.constant 0 : index
    %60 = vector.load %arg4[%c2_27, %c0_28] : memref<4x128xf32, #tpu.memory_space<vmem>>, vector<1x128xf32>
    %61 = vector.shape_cast %60 : vector<1x128xf32> to vector<1x1x128xf32>
    %62 = vector.broadcast %59 : vector<5x9x1xf32> to vector<5x9x128xf32>
    %63 = vector.broadcast %61 : vector<1x1x128xf32> to vector<5x9x128xf32>
    %64 = arith.mulf %62, %63 : vector<5x9x128xf32>
    %65 = arith.addf %58, %64 : vector<5x9x128xf32>
    %66 = vector.extract_strided_slice %45 {offsets = [0, 0, 3], sizes = [5, 9, 1], strides = [1, 1, 1]} : vector<5x9x4xf32> to vector<5x9x1xf32>
    %c3_29 = arith.constant 3 : index
    %c0_30 = arith.constant 0 : index
    %67 = vector.load %arg4[%c3_29, %c0_30] : memref<4x128xf32, #tpu.memory_space<vmem>>, vector<1x128xf32>
    %68 = vector.shape_cast %67 : vector<1x128xf32> to vector<1x1x128xf32>
    %69 = vector.broadcast %66 : vector<5x9x1xf32> to vector<5x9x128xf32>
    %70 = vector.broadcast %68 : vector<1x1x128xf32> to vector<5x9x128xf32>
    %71 = arith.mulf %69, %70 : vector<5x9x128xf32>
    %72 = arith.addf %65, %71 : vector<5x9x128xf32>
    %73 = vector.shape_cast %0 : vector<1x128xf32> to vector<1x1x128xf32>
    %74 = vector.broadcast %73 : vector<1x1x128xf32> to vector<5x9x128xf32>
    %75 = arith.addf %72, %74 : vector<5x9x128xf32>
    %cst_31 = arith.constant 0.000000e+00 : f32
    %76 = vector.broadcast %cst_31 : f32 to vector<5x9x128xf32>
    %77 = arith.cmpf ogt, %75, %76 : vector<5x9x128xf32>
    %78 = vector.shape_cast %1 : vector<1x128xf32> to vector<1x1x128xf32>
    %79 = vector.broadcast %78 : vector<1x1x128xf32> to vector<5x9x128xf32>
    %80 = arith.mulf %75, %79 : vector<5x9x128xf32>
    %81 = arith.select %77, %75, %80 : vector<5x9x128xi1>, vector<5x9x128xf32>
    %c0_32 = arith.constant 0 : index
    %c1_33 = arith.constant 1 : index
    %c0_34 = arith.constant 0 : index
    %c0_35 = arith.constant 0 : index
    %c0_36 = arith.constant 0 : index
    %82 = vector.load %arg3[%c0_32, %c1_33, %c0_34, %c0_35, %c0_36] : memref<1x4x5x9x1xf32, #tpu.memory_space<vmem>>, vector<1x1x5x9x1xf32>
    %83 = vector.shape_cast %82 : vector<1x1x5x9x1xf32> to vector<5x9x1xf32>
    %84 = vector.broadcast %83 : vector<5x9x1xf32> to vector<5x9x128xf32>
    %85 = arith.mulf %81, %84 : vector<5x9x128xf32>
    %c0_37 = arith.constant 0 : index
    %c2_38 = arith.constant 2 : index
    %c0_39 = arith.constant 0 : index
    %c0_40 = arith.constant 0 : index
    %c0_41 = arith.constant 0 : index
    %86 = vector.load %arg2[%c0_37, %c2_38, %c0_39, %c0_40, %c0_41] : memref<1x4x5x9x4xf32, #tpu.memory_space<vmem>>, vector<1x1x5x9x4xf32>
    %87 = vector.shape_cast %86 : vector<1x1x5x9x4xf32> to vector<5x9x4xf32>
    %88 = vector.extract_strided_slice %87 {offsets = [0, 0, 0], sizes = [5, 9, 1], strides = [1, 1, 1]} : vector<5x9x4xf32> to vector<5x9x1xf32>
    %c0_42 = arith.constant 0 : index
    %c0_43 = arith.constant 0 : index
    %89 = vector.load %arg4[%c0_42, %c0_43] : memref<4x128xf32, #tpu.memory_space<vmem>>, vector<1x128xf32>
    %90 = vector.shape_cast %89 : vector<1x128xf32> to vector<1x1x128xf32>
    %91 = vector.broadcast %88 : vector<5x9x1xf32> to vector<5x9x128xf32>
    %92 = vector.broadcast %90 : vector<1x1x128xf32> to vector<5x9x128xf32>
    %93 = arith.mulf %91, %92 : vector<5x9x128xf32>
    %94 = vector.extract_strided_slice %87 {offsets = [0, 0, 1], sizes = [5, 9, 1], strides = [1, 1, 1]} : vector<5x9x4xf32> to vector<5x9x1xf32>
    %c1_44 = arith.constant 1 : index
    %c0_45 = arith.constant 0 : index
    %95 = vector.load %arg4[%c1_44, %c0_45] : memref<4x128xf32, #tpu.memory_space<vmem>>, vector<1x128xf32>
    %96 = vector.shape_cast %95 : vector<1x128xf32> to vector<1x1x128xf32>
    %97 = vector.broadcast %94 : vector<5x9x1xf32> to vector<5x9x128xf32>
    %98 = vector.broadcast %96 : vector<1x1x128xf32> to vector<5x9x128xf32>
    %99 = arith.mulf %97, %98 : vector<5x9x128xf32>
    %100 = arith.addf %93, %99 : vector<5x9x128xf32>
    %101 = vector.extract_strided_slice %87 {offsets = [0, 0, 2], sizes = [5, 9, 1], strides = [1, 1, 1]} : vector<5x9x4xf32> to vector<5x9x1xf32>
    %c2_46 = arith.constant 2 : index
    %c0_47 = arith.constant 0 : index
    %102 = vector.load %arg4[%c2_46, %c0_47] : memref<4x128xf32, #tpu.memory_space<vmem>>, vector<1x128xf32>
    %103 = vector.shape_cast %102 : vector<1x128xf32> to vector<1x1x128xf32>
    %104 = vector.broadcast %101 : vector<5x9x1xf32> to vector<5x9x128xf32>
    %105 = vector.broadcast %103 : vector<1x1x128xf32> to vector<5x9x128xf32>
    %106 = arith.mulf %104, %105 : vector<5x9x128xf32>
    %107 = arith.addf %100, %106 : vector<5x9x128xf32>
    %108 = vector.extract_strided_slice %87 {offsets = [0, 0, 3], sizes = [5, 9, 1], strides = [1, 1, 1]} : vector<5x9x4xf32> to vector<5x9x1xf32>
    %c3_48 = arith.constant 3 : index
    %c0_49 = arith.constant 0 : index
    %109 = vector.load %arg4[%c3_48, %c0_49] : memref<4x128xf32, #tpu.memory_space<vmem>>, vector<1x128xf32>
    %110 = vector.shape_cast %109 : vector<1x128xf32> to vector<1x1x128xf32>
    %111 = vector.broadcast %108 : vector<5x9x1xf32> to vector<5x9x128xf32>
    %112 = vector.broadcast %110 : vector<1x1x128xf32> to vector<5x9x128xf32>
    %113 = arith.mulf %111, %112 : vector<5x9x128xf32>
    %114 = arith.addf %107, %113 : vector<5x9x128xf32>
    %115 = vector.shape_cast %0 : vector<1x128xf32> to vector<1x1x128xf32>
    %116 = vector.broadcast %115 : vector<1x1x128xf32> to vector<5x9x128xf32>
    %117 = arith.addf %114, %116 : vector<5x9x128xf32>
    %cst_50 = arith.constant 0.000000e+00 : f32
    %118 = vector.broadcast %cst_50 : f32 to vector<5x9x128xf32>
    %119 = arith.cmpf ogt, %117, %118 : vector<5x9x128xf32>
    %120 = vector.shape_cast %1 : vector<1x128xf32> to vector<1x1x128xf32>
    %121 = vector.broadcast %120 : vector<1x1x128xf32> to vector<5x9x128xf32>
    %122 = arith.mulf %117, %121 : vector<5x9x128xf32>
    %123 = arith.select %119, %117, %122 : vector<5x9x128xi1>, vector<5x9x128xf32>
    %c0_51 = arith.constant 0 : index
    %c2_52 = arith.constant 2 : index
    %c0_53 = arith.constant 0 : index
    %c0_54 = arith.constant 0 : index
    %c0_55 = arith.constant 0 : index
    %124 = vector.load %arg3[%c0_51, %c2_52, %c0_53, %c0_54, %c0_55] : memref<1x4x5x9x1xf32, #tpu.memory_space<vmem>>, vector<1x1x5x9x1xf32>
    %125 = vector.shape_cast %124 : vector<1x1x5x9x1xf32> to vector<5x9x1xf32>
    %126 = vector.broadcast %125 : vector<5x9x1xf32> to vector<5x9x128xf32>
    %127 = arith.mulf %123, %126 : vector<5x9x128xf32>
    %c0_56 = arith.constant 0 : index
    %c3_57 = arith.constant 3 : index
    %c0_58 = arith.constant 0 : index
    %c0_59 = arith.constant 0 : index
    %c0_60 = arith.constant 0 : index
    %128 = vector.load %arg2[%c0_56, %c3_57, %c0_58, %c0_59, %c0_60] : memref<1x4x5x9x4xf32, #tpu.memory_space<vmem>>, vector<1x1x5x9x4xf32>
    %129 = vector.shape_cast %128 : vector<1x1x5x9x4xf32> to vector<5x9x4xf32>
    %130 = vector.extract_strided_slice %129 {offsets = [0, 0, 0], sizes = [5, 9, 1], strides = [1, 1, 1]} : vector<5x9x4xf32> to vector<5x9x1xf32>
    %c0_61 = arith.constant 0 : index
    %c0_62 = arith.constant 0 : index
    %131 = vector.load %arg4[%c0_61, %c0_62] : memref<4x128xf32, #tpu.memory_space<vmem>>, vector<1x128xf32>
    %132 = vector.shape_cast %131 : vector<1x128xf32> to vector<1x1x128xf32>
    %133 = vector.broadcast %130 : vector<5x9x1xf32> to vector<5x9x128xf32>
    %134 = vector.broadcast %132 : vector<1x1x128xf32> to vector<5x9x128xf32>
    %135 = arith.mulf %133, %134 : vector<5x9x128xf32>
    %136 = vector.extract_strided_slice %129 {offsets = [0, 0, 1], sizes = [5, 9, 1], strides = [1, 1, 1]} : vector<5x9x4xf32> to vector<5x9x1xf32>
    %c1_63 = arith.constant 1 : index
    %c0_64 = arith.constant 0 : index
    %137 = vector.load %arg4[%c1_63, %c0_64] : memref<4x128xf32, #tpu.memory_space<vmem>>, vector<1x128xf32>
    %138 = vector.shape_cast %137 : vector<1x128xf32> to vector<1x1x128xf32>
    %139 = vector.broadcast %136 : vector<5x9x1xf32> to vector<5x9x128xf32>
    %140 = vector.broadcast %138 : vector<1x1x128xf32> to vector<5x9x128xf32>
    %141 = arith.mulf %139, %140 : vector<5x9x128xf32>
    %142 = arith.addf %135, %141 : vector<5x9x128xf32>
    %143 = vector.extract_strided_slice %129 {offsets = [0, 0, 2], sizes = [5, 9, 1], strides = [1, 1, 1]} : vector<5x9x4xf32> to vector<5x9x1xf32>
    %c2_65 = arith.constant 2 : index
    %c0_66 = arith.constant 0 : index
    %144 = vector.load %arg4[%c2_65, %c0_66] : memref<4x128xf32, #tpu.memory_space<vmem>>, vector<1x128xf32>
    %145 = vector.shape_cast %144 : vector<1x128xf32> to vector<1x1x128xf32>
    %146 = vector.broadcast %143 : vector<5x9x1xf32> to vector<5x9x128xf32>
    %147 = vector.broadcast %145 : vector<1x1x128xf32> to vector<5x9x128xf32>
    %148 = arith.mulf %146, %147 : vector<5x9x128xf32>
    %149 = arith.addf %142, %148 : vector<5x9x128xf32>
    %150 = vector.extract_strided_slice %129 {offsets = [0, 0, 3], sizes = [5, 9, 1], strides = [1, 1, 1]} : vector<5x9x4xf32> to vector<5x9x1xf32>
    %c3_67 = arith.constant 3 : index
    %c0_68 = arith.constant 0 : index
    %151 = vector.load %arg4[%c3_67, %c0_68] : memref<4x128xf32, #tpu.memory_space<vmem>>, vector<1x128xf32>
    %152 = vector.shape_cast %151 : vector<1x128xf32> to vector<1x1x128xf32>
    %153 = vector.broadcast %150 : vector<5x9x1xf32> to vector<5x9x128xf32>
    %154 = vector.broadcast %152 : vector<1x1x128xf32> to vector<5x9x128xf32>
    %155 = arith.mulf %153, %154 : vector<5x9x128xf32>
    %156 = arith.addf %149, %155 : vector<5x9x128xf32>
    %157 = vector.shape_cast %0 : vector<1x128xf32> to vector<1x1x128xf32>
    %158 = vector.broadcast %157 : vector<1x1x128xf32> to vector<5x9x128xf32>
    %159 = arith.addf %156, %158 : vector<5x9x128xf32>
    %cst_69 = arith.constant 0.000000e+00 : f32
    %160 = vector.broadcast %cst_69 : f32 to vector<5x9x128xf32>
    %161 = arith.cmpf ogt, %159, %160 : vector<5x9x128xf32>
    %162 = vector.shape_cast %1 : vector<1x128xf32> to vector<1x1x128xf32>
    %163 = vector.broadcast %162 : vector<1x1x128xf32> to vector<5x9x128xf32>
    %164 = arith.mulf %159, %163 : vector<5x9x128xf32>
    %165 = arith.select %161, %159, %164 : vector<5x9x128xi1>, vector<5x9x128xf32>
    %c0_70 = arith.constant 0 : index
    %c3_71 = arith.constant 3 : index
    %c0_72 = arith.constant 0 : index
    %c0_73 = arith.constant 0 : index
    %c0_74 = arith.constant 0 : index
    %166 = vector.load %arg3[%c0_70, %c3_71, %c0_72, %c0_73, %c0_74] : memref<1x4x5x9x1xf32, #tpu.memory_space<vmem>>, vector<1x1x5x9x1xf32>
    %167 = vector.shape_cast %166 : vector<1x1x5x9x1xf32> to vector<5x9x1xf32>
    %168 = vector.broadcast %167 : vector<5x9x1xf32> to vector<5x9x128xf32>
    %169 = arith.mulf %165, %168 : vector<5x9x128xf32>
    %170 = vector.extract_strided_slice %43 {offsets = [0, 0, 0], sizes = [4, 8, 128], strides = [1, 1, 1]} : vector<5x9x128xf32> to vector<4x8x128xf32>
    %c0_75 = arith.constant 0 : index
    %c0_76 = arith.constant 0 : index
    %171 = vector.load %arg7[%c0_75, %c0_76] : memref<9x128xf32, #tpu.memory_space<vmem>>, vector<1x128xf32>
    %172 = vector.shape_cast %171 : vector<1x128xf32> to vector<1x1x128xf32>
    %173 = vector.broadcast %172 : vector<1x1x128xf32> to vector<4x8x128xf32>
    %174 = arith.mulf %170, %173 : vector<4x8x128xf32>
    %175 = vector.extract_strided_slice %85 {offsets = [0, 0, 0], sizes = [4, 8, 128], strides = [1, 1, 1]} : vector<5x9x128xf32> to vector<4x8x128xf32>
    %c1_77 = arith.constant 1 : index
    %c0_78 = arith.constant 0 : index
    %176 = vector.load %arg7[%c1_77, %c0_78] : memref<9x128xf32, #tpu.memory_space<vmem>>, vector<1x128xf32>
    %177 = vector.shape_cast %176 : vector<1x128xf32> to vector<1x1x128xf32>
    %178 = vector.broadcast %177 : vector<1x1x128xf32> to vector<4x8x128xf32>
    %179 = arith.mulf %175, %178 : vector<4x8x128xf32>
    %180 = arith.addf %174, %179 : vector<4x8x128xf32>
    %181 = vector.extract_strided_slice %43 {offsets = [0, 1, 0], sizes = [4, 8, 128], strides = [1, 1, 1]} : vector<5x9x128xf32> to vector<4x8x128xf32>
    %c2_79 = arith.constant 2 : index
    %c0_80 = arith.constant 0 : index
    %182 = vector.load %arg7[%c2_79, %c0_80] : memref<9x128xf32, #tpu.memory_space<vmem>>, vector<1x128xf32>
    %183 = vector.shape_cast %182 : vector<1x128xf32> to vector<1x1x128xf32>
    %184 = vector.broadcast %183 : vector<1x1x128xf32> to vector<4x8x128xf32>
    %185 = arith.mulf %181, %184 : vector<4x8x128xf32>
    %186 = arith.addf %180, %185 : vector<4x8x128xf32>
    %187 = vector.extract_strided_slice %127 {offsets = [0, 0, 0], sizes = [4, 8, 128], strides = [1, 1, 1]} : vector<5x9x128xf32> to vector<4x8x128xf32>
    %c3_81 = arith.constant 3 : index
    %c0_82 = arith.constant 0 : index
    %188 = vector.load %arg7[%c3_81, %c0_82] : memref<9x128xf32, #tpu.memory_space<vmem>>, vector<1x128xf32>
    %189 = vector.shape_cast %188 : vector<1x128xf32> to vector<1x1x128xf32>
    %190 = vector.broadcast %189 : vector<1x1x128xf32> to vector<4x8x128xf32>
    %191 = arith.mulf %187, %190 : vector<4x8x128xf32>
    %192 = arith.addf %186, %191 : vector<4x8x128xf32>
    %193 = vector.extract_strided_slice %169 {offsets = [0, 0, 0], sizes = [4, 8, 128], strides = [1, 1, 1]} : vector<5x9x128xf32> to vector<4x8x128xf32>
    %c4 = arith.constant 4 : index
    %c0_83 = arith.constant 0 : index
    %194 = vector.load %arg7[%c4, %c0_83] : memref<9x128xf32, #tpu.memory_space<vmem>>, vector<1x128xf32>
    %195 = vector.shape_cast %194 : vector<1x128xf32> to vector<1x1x128xf32>
    %196 = vector.broadcast %195 : vector<1x1x128xf32> to vector<4x8x128xf32>
    %197 = arith.mulf %193, %196 : vector<4x8x128xf32>
    %198 = arith.addf %192, %197 : vector<4x8x128xf32>
    %199 = vector.extract_strided_slice %127 {offsets = [0, 1, 0], sizes = [4, 8, 128], strides = [1, 1, 1]} : vector<5x9x128xf32> to vector<4x8x128xf32>
    %c5 = arith.constant 5 : index
    %c0_84 = arith.constant 0 : index
    %200 = vector.load %arg7[%c5, %c0_84] : memref<9x128xf32, #tpu.memory_space<vmem>>, vector<1x128xf32>
    %201 = vector.shape_cast %200 : vector<1x128xf32> to vector<1x1x128xf32>
    %202 = vector.broadcast %201 : vector<1x1x128xf32> to vector<4x8x128xf32>
    %203 = arith.mulf %199, %202 : vector<4x8x128xf32>
    %204 = arith.addf %198, %203 : vector<4x8x128xf32>
    %205 = vector.extract_strided_slice %43 {offsets = [1, 0, 0], sizes = [4, 8, 128], strides = [1, 1, 1]} : vector<5x9x128xf32> to vector<4x8x128xf32>
    %c6 = arith.constant 6 : index
    %c0_85 = arith.constant 0 : index
    %206 = vector.load %arg7[%c6, %c0_85] : memref<9x128xf32, #tpu.memory_space<vmem>>, vector<1x128xf32>
    %207 = vector.shape_cast %206 : vector<1x128xf32> to vector<1x1x128xf32>
    %208 = vector.broadcast %207 : vector<1x1x128xf32> to vector<4x8x128xf32>
    %209 = arith.mulf %205, %208 : vector<4x8x128xf32>
    %210 = arith.addf %204, %209 : vector<4x8x128xf32>
    %211 = vector.extract_strided_slice %85 {offsets = [1, 0, 0], sizes = [4, 8, 128], strides = [1, 1, 1]} : vector<5x9x128xf32> to vector<4x8x128xf32>
    %c7 = arith.constant 7 : index
    %c0_86 = arith.constant 0 : index
    %212 = vector.load %arg7[%c7, %c0_86] : memref<9x128xf32, #tpu.memory_space<vmem>>, vector<1x128xf32>
    %213 = vector.shape_cast %212 : vector<1x128xf32> to vector<1x1x128xf32>
    %214 = vector.broadcast %213 : vector<1x1x128xf32> to vector<4x8x128xf32>
    %215 = arith.mulf %211, %214 : vector<4x8x128xf32>
    %216 = arith.addf %210, %215 : vector<4x8x128xf32>
    %217 = vector.extract_strided_slice %43 {offsets = [1, 1, 0], sizes = [4, 8, 128], strides = [1, 1, 1]} : vector<5x9x128xf32> to vector<4x8x128xf32>
    %c8 = arith.constant 8 : index
    %c0_87 = arith.constant 0 : index
    %218 = vector.load %arg7[%c8, %c0_87] : memref<9x128xf32, #tpu.memory_space<vmem>>, vector<1x128xf32>
    %219 = vector.shape_cast %218 : vector<1x128xf32> to vector<1x1x128xf32>
    %220 = vector.broadcast %219 : vector<1x1x128xf32> to vector<4x8x128xf32>
    %221 = arith.mulf %217, %220 : vector<4x8x128xf32>
    %222 = arith.addf %216, %221 : vector<4x8x128xf32>
    %c0_88 = arith.constant 0 : index
    %c0_89 = arith.constant 0 : index
    %223 = vector.load %arg8[%c0_88, %c0_89] : memref<1x128xf32, #tpu.memory_space<vmem>>, vector<1x128xf32>
    %224 = vector.shape_cast %223 : vector<1x128xf32> to vector<1x1x128xf32>
    %225 = vector.broadcast %224 : vector<1x1x128xf32> to vector<4x8x128xf32>
    %226 = arith.addf %222, %225 : vector<4x8x128xf32>
    %cst_90 = arith.constant 0.000000e+00 : f32
    %227 = vector.broadcast %cst_90 : f32 to vector<4x8x128xf32>
    %228 = arith.cmpf ogt, %226, %227 : vector<4x8x128xf32>
    %c0_91 = arith.constant 0 : index
    %c0_92 = arith.constant 0 : index
    %229 = vector.load %arg9[%c0_91, %c0_92] : memref<1x128xf32, #tpu.memory_space<vmem>>, vector<1x128xf32>
    %230 = vector.shape_cast %229 : vector<1x128xf32> to vector<1x1x128xf32>
    %231 = vector.broadcast %230 : vector<1x1x128xf32> to vector<4x8x128xf32>
    %232 = arith.mulf %226, %231 : vector<4x8x128xf32>
    %233 = arith.select %228, %226, %232 : vector<4x8x128xi1>, vector<4x8x128xf32>
    %234 = vector.shape_cast %233 : vector<4x8x128xf32> to vector<32x128xf32>
    %c0_93 = arith.constant 0 : index
    %c0_94 = arith.constant 0 : index
    %235 = vector.load %arg10[%c0_93, %c0_94] : memref<128x128xf32, #tpu.memory_space<vmem>>, vector<128x128xf32>
    %cst_95 = arith.constant dense<0.000000e+00> : vector<32x128xf32>
    %236 = tpu.matmul %234, %235, %cst_95 {dimension_numbers = #tpu.dot_dimension_numbers<[1], [0], [0], [1], [0, 0, 1, 1], [], []>} : vector<32x128xf32>, vector<128x128xf32>, vector<32x128xf32> -> vector<32x128xf32>
    %c0_96 = arith.constant 0 : index
    %c0_97 = arith.constant 0 : index
    %237 = vector.load %arg11[%c0_96, %c0_97] : memref<1x128xf32, #tpu.memory_space<vmem>>, vector<1x128xf32>
    %238 = vector.broadcast %237 : vector<1x128xf32> to vector<32x128xf32>
    %239 = arith.addf %236, %238 : vector<32x128xf32>
    %c0_98 = arith.constant 0 : index
    %c0_99 = arith.constant 0 : index
    %c0_100 = arith.constant 0 : index
    %240 = vector.load %arg12[%c0_98, %c0_99, %c0_100] : memref<1x32x128xf32, #tpu.memory_space<vmem>>, vector<1x32x128xf32>
    %241 = vector.shape_cast %240 : vector<1x32x128xf32> to vector<32x128xf32>
    %242 = vector.shape_cast %239 : vector<32x128xf32> to vector<1x32x128xf32>
    tpu.vector_store %arg12[%c0_98, %c0_99, %c0_100], %242 {strides = array<i32>} : memref<1x32x128xf32, #tpu.memory_space<vmem>>, vector<1x32x128xf32>,
    return
  }
  func.func @transform_0(%arg0: i32, %arg1: i32) -> (i32, i32, i32, i32, i32) {
    %c2_i32 = arith.constant 2 : i32
    %0 = arith.muli %arg0, %c2_i32 : i32
    %1 = arith.addi %0, %arg1 : i32
    %c0_i32 = arith.constant 0 : i32
    %c0_i32_0 = arith.constant 0 : i32
    %c0_i32_1 = arith.constant 0 : i32
    %c0_i32_2 = arith.constant 0 : i32
    %c0_i32_3 = arith.constant 0 : i32
    return %1, %c0_i32, %c0_i32_0, %c0_i32_1, %c0_i32_2 : i32, i32, i32, i32, i32
  }
  func.func @transform_1(%arg0: i32, %arg1: i32) -> (i32, i32, i32, i32, i32) {
    %c0_i32 = arith.constant 0 : i32
    %c0_i32_0 = arith.constant 0 : i32
    %c0_i32_1 = arith.constant 0 : i32
    %c0_i32_2 = arith.constant 0 : i32
    %c0_i32_3 = arith.constant 0 : i32
    return %arg1, %c0_i32, %c0_i32_0, %c0_i32_1, %c0_i32_2 : i32, i32, i32, i32, i32
  }
  func.func @transform_2(%arg0: i32, %arg1: i32) -> (i32, i32) {
    %c0_i32 = arith.constant 0 : i32
    %c0_i32_0 = arith.constant 0 : i32
    %c0_i32_1 = arith.constant 0 : i32
    return %c0_i32, %c0_i32_0 : i32, i32
  }
  func.func @transform_3(%arg0: i32, %arg1: i32) -> (i32, i32) {
    %c0_i32 = arith.constant 0 : i32
    %c0_i32_0 = arith.constant 0 : i32
    %c0_i32_1 = arith.constant 0 : i32
    return %c0_i32, %c0_i32_0 : i32, i32
  }
  func.func @transform_4(%arg0: i32, %arg1: i32) -> (i32, i32) {
    %c0_i32 = arith.constant 0 : i32
    %c0_i32_0 = arith.constant 0 : i32
    %c0_i32_1 = arith.constant 0 : i32
    return %c0_i32, %c0_i32_0 : i32, i32
  }
  func.func @transform_5(%arg0: i32, %arg1: i32) -> (i32, i32) {
    %c0_i32 = arith.constant 0 : i32
    %c0_i32_0 = arith.constant 0 : i32
    %c0_i32_1 = arith.constant 0 : i32
    return %c0_i32, %c0_i32_0 : i32, i32
  }
  func.func @transform_6(%arg0: i32, %arg1: i32) -> (i32, i32) {
    %c0_i32 = arith.constant 0 : i32
    %c0_i32_0 = arith.constant 0 : i32
    %c0_i32_1 = arith.constant 0 : i32
    return %c0_i32, %c0_i32_0 : i32, i32
  }
  func.func @transform_7(%arg0: i32, %arg1: i32) -> (i32, i32) {
    %c0_i32 = arith.constant 0 : i32
    %c0_i32_0 = arith.constant 0 : i32
    %c0_i32_1 = arith.constant 0 : i32
    return %c0_i32, %c0_i32_0 : i32, i32
  }
  func.func @transform_8(%arg0: i32, %arg1: i32) -> (i32, i32) {
    %c0_i32 = arith.constant 0 : i32
    %c0_i32_0 = arith.constant 0 : i32
    %c0_i32_1 = arith.constant 0 : i32
    return %c0_i32, %c0_i32_0 : i32, i32
  }
  func.func @transform_9(%arg0: i32, %arg1: i32) -> (i32, i32) {
    %c0_i32 = arith.constant 0 : i32
    %c0_i32_0 = arith.constant 0 : i32
    %c0_i32_1 = arith.constant 0 : i32
    return %c0_i32, %c0_i32_0 : i32, i32
  }
  func.func @transform_10(%arg0: i32, %arg1: i32) -> (i32, i32, i32) {
    %c0_i32 = arith.constant 0 : i32
    %c0_i32_0 = arith.constant 0 : i32
    return %arg0, %arg1, %c0_i32 : i32, i32, i32
  }
}

</mosaic_0001>

<llo_original>
// kernel: tpu_custom_call.1
$region0: #{tpu_custom_call.1}
  #allocation0 [shape = 'u32[]', space=smem, size = 0x4, offset = 0x4, fixed_abs, tag = 'smem constant byte address 0x4 - core index']
  #allocation1 [shape = 'u32[144,128]{1,0:T(1,128)}', space=vmem, size = 0x12000, scoped, tag = 'internal scratch']
  %s0 = inlined_call_operand.vmem [shape: f32[4,4,5,9,4], index: 0, kind: input, shape index: {}]
  %s1 = inlined_call_operand.vmem [shape: f32[2,4,5,9,1], index: 1, kind: input, shape index: {}]
  %s2 = inlined_call_operand.vmem [shape: f32[4,128], index: 2, kind: input, shape index: {}]
  %s3 = inlined_call_operand.vmem [shape: f32[1,128], index: 3, kind: input, shape index: {}]
  %s4 = inlined_call_operand.vmem [shape: f32[1,128], index: 4, kind: input, shape index: {}]
  %s5 = inlined_call_operand.vmem [shape: f32[9,128], index: 5, kind: input, shape index: {}]
  %s6 = inlined_call_operand.vmem [shape: f32[1,128], index: 6, kind: input, shape index: {}]
  %s7 = inlined_call_operand.vmem [shape: f32[1,128], index: 7, kind: input, shape index: {}]
  %s8 = inlined_call_operand.vmem [shape: f32[128,128], index: 8, kind: input, shape index: {}]
  %s9 = inlined_call_operand.vmem [shape: f32[1,128], index: 9, kind: input, shape index: {}]
  %s10 = inlined_call_operand.hbm [shape: f32[2,64,128], index: 10, kind: output, shape index: {}]
  %s11 = sld [smem:[#allocation0]]
  $region73: #{tpu_custom_call.1} parent=0
    _
  %s13 = ssub.s32 1, %s11
  %s14 = scalar_select 0, %s13, %s11
  $region1: #{tpu_custom_call.1} parent=0
    #allocation2 [shape = 'u8[32768]{0}', space=vmem, size = 0x8000, scoped, tag = 'output window, operand 0']
    #allocation3 [shape = 's32[2]{0}', space=sflag, size = 0x8, scoped, tag = 'scoped memory for tpu_custom_call.1']
    %15 = vsyncpa [#allocation3], 0
    %s16 = scalar_lea.sflag [#allocation3], 1
    %17 = vsyncpa %s16, 0
    loop: start=0, step=1, limit=6
    $region2: #{tpu_custom_call.1} parent=1 // loop_pre_header
      _
    $region3: #{tpu_custom_call.1} parent=1 // loop_header
      %s19 = sphi 0, %s23
      %p20 = scmp.ge.s32.totalorder %s19, 6
      %s26 = sphi 0, %s38
      %s27 = sphi 0, %s34
      %s28 = sphi 0, %s26
      %s29 = sphi 0, %s27
      %s30 = sphi 0, %s28
      %s31 = sphi 0, %s29
      %s45 = sphi 0, %s47
      %s48 = sphi 0, %s45
      %s49 = sphi 0, %s48
      %s65 = sphi 0, %s49
      %s71 = sphi 0, %s73
      %s74 = sphi 0, %s71
      %s75 = sphi 0, %s74
      %s91 = sphi 0, %s75
      %s95 = sphi 0, %s95
      %s97 = sphi 0, %s95
      %s98 = sphi 0, %s97
      %s112 = sphi 0, %s98
      %s116 = sphi 0, %s116
      %s118 = sphi 0, %s116
      %s119 = sphi 0, %s118
      %s133 = sphi 0, %s119
      %s137 = sphi 0, %s137
      %s139 = sphi 0, %s137
      %s140 = sphi 0, %s139
      %s154 = sphi 0, %s140
      %s158 = sphi 0, %s158
      %s160 = sphi 0, %s158
      %s161 = sphi 0, %s160
      %s175 = sphi 0, %s161
      %s179 = sphi 0, %s179
      %s181 = sphi 0, %s179
      %s182 = sphi 0, %s181
      %s196 = sphi 0, %s182
      %s200 = sphi 0, %s200
      %s202 = sphi 0, %s200
      %s203 = sphi 0, %s202
      %s217 = sphi 0, %s203
      %s221 = sphi 0, %s221
      %s223 = sphi 0, %s221
      %s224 = sphi 0, %s223
      %s238 = sphi 0, %s224
      %s242 = sphi 0, %s242
      %s244 = sphi 0, %s242
      %s245 = sphi 0, %s244
      %s259 = sphi 0, %s245
      %s267 = sphi 0, %s269
      %s270 = sphi 0, %s267
      %s271 = sphi 0, %s270
      %s287 = sphi 0, %s271
    $region4: #{tpu_custom_call.1} parent=1 // loop_header_branch
      %22 = sbr.rel (%p20) target = $region8
    $region5: #{tpu_custom_call.1} parent=1 // loop_body
      %s24 = ssub.s32 %s19, 1
      %s25 = ssub.s32 %s19, 2
      %s32 = sadd.s32 1, %s27
      %p33 = scmp.ge.s32.totalorder %s32, 2
      %s34 = scalar_select %p33, 0, %s32
      %s35 = sadd.s32 1, %s26
      %s36 = scalar_select %p33, %s35, %s26
      %p37 = scmp.ge.s32.totalorder %s36, 2
      %s38 = scalar_select %p37, 0, %s36
      %s39 = smul.u32 %s26, 2
      %s40 = sadd.s32 %s39, %s27
      %s41 = smul.u32 %s38, 2
      %s42 = sadd.s32 %s41, %s34
      %s43 = ssub.s32 %s40, %s42
      %p44 = scmp.eq.s32.totalorder %s43, 0
      %s46 = sadd.s32 %s45, 1
      %s47 = scalar_select %p44, %s45, %s46
      %p50 = pneg %p44
      %p51 = scmp.eq.s32.totalorder %s19, 3
      %p52 = por %p50, %p51
      %p53 = scmp.ne.s32.totalorder %s45, %s48
      %p54 = scmp.eq.s32.totalorder %s19, 0
      %p55 = por %p53, %p54
      %p56 = scmp.ne.s32.totalorder %s45, %s48
      %p57 = scmp.eq.s32.totalorder %s24, 3
      %p58 = por %p56, %p57
      %p59 = scmp.ne.s32.totalorder %s48, %s49
      %p60 = scmp.eq.s32.totalorder %s24, 0
      %p61 = por %p59, %p60
      %p62 = scmp.ne.s32.totalorder %s48, %s49
      %p63 = scmp.eq.s32.totalorder %s25, 3
      %p64 = por %p62, %p63
      %p66 = scmp.ne.s32.totalorder %s49, %s65
      %p67 = scmp.eq.s32.totalorder %s25, 0
      %p68 = por %p66, %p67
      %s69 = ssub.s32 %s27, %s34
      %p70 = scmp.eq.s32.totalorder %s69, 0
      %s72 = sadd.s32 %s71, 1
      %s73 = scalar_select %p70, %s71, %s72
      %p76 = pneg %p70
      %p77 = scmp.eq.s32.totalorder %s19, 3
      %p78 = por %p76, %p77
      %p79 = scmp.ne.s32.totalorder %s71, %s74
      %p80 = scmp.eq.s32.totalorder %s19, 0
      %p81 = por %p79, %p80
      %p82 = scmp.ne.s32.totalorder %s71, %s74
      %p83 = scmp.eq.s32.totalorder %s24, 3
      %p84 = por %p82, %p83
      %p85 = scmp.ne.s32.totalorder %s74, %s75
      %p86 = scmp.eq.s32.totalorder %s24, 0
      %p87 = por %p85, %p86
      %p88 = scmp.ne.s32.totalorder %s74, %s75
      %p89 = scmp.eq.s32.totalorder %s25, 3
      %p90 = por %p88, %p89
      %p92 = scmp.ne.s32.totalorder %s75, %s91
      %p93 = scmp.eq.s32.totalorder %s25, 0
      %p94 = por %p92, %p93
      %s96 = sadd.s32 %s95, 1
      %p99 = scmp.eq.s32.totalorder %s19, 3
      %p100 = scmp.ne.s32.totalorder %s95, %s97
      %p101 = scmp.eq.s32.totalorder %s19, 0
      %p102 = por %p100, %p101
      %p103 = scmp.ne.s32.totalorder %s95, %s97
      %p104 = scmp.eq.s32.totalorder %s24, 3
      %p105 = por %p103, %p104
      %p106 = scmp.ne.s32.totalorder %s97, %s98
      %p107 = scmp.eq.s32.totalorder %s24, 0
      %p108 = por %p106, %p107
      %p109 = scmp.ne.s32.totalorder %s97, %s98
      %p110 = scmp.eq.s32.totalorder %s25, 3
      %p111 = por %p109, %p110
      %p113 = scmp.ne.s32.totalorder %s98, %s112
      %p114 = scmp.eq.s32.totalorder %s25, 0
      %p115 = por %p113, %p114
      %s117 = sadd.s32 %s116, 1
      %p120 = scmp.eq.s32.totalorder %s19, 3
      %p121 = scmp.ne.s32.totalorder %s116, %s118
      %p122 = scmp.eq.s32.totalorder %s19, 0
      %p123 = por %p121, %p122
      %p124 = scmp.ne.s32.totalorder %s116, %s118
      %p125 = scmp.eq.s32.totalorder %s24, 3
      %p126 = por %p124, %p125
      %p127 = scmp.ne.s32.totalorder %s118, %s119
      %p128 = scmp.eq.s32.totalorder %s24, 0
      %p129 = por %p127, %p128
      %p130 = scmp.ne.s32.totalorder %s118, %s119
      %p131 = scmp.eq.s32.totalorder %s25, 3
      %p132 = por %p130, %p131
      %p134 = scmp.ne.s32.totalorder %s119, %s133
      %p135 = scmp.eq.s32.totalorder %s25, 0
      %p136 = por %p134, %p135
      %s138 = sadd.s32 %s137, 1
      %p141 = scmp.eq.s32.totalorder %s19, 3
      %p142 = scmp.ne.s32.totalorder %s137, %s139
      %p143 = scmp.eq.s32.totalorder %s19, 0
      %p144 = por %p142, %p143
      %p145 = scmp.ne.s32.totalorder %s137, %s139
      %p146 = scmp.eq.s32.totalorder %s24, 3
      %p147 = por %p145, %p146
      %p148 = scmp.ne.s32.totalorder %s139, %s140
      %p149 = scmp.eq.s32.totalorder %s24, 0
      %p150 = por %p148, %p149
      %p151 = scmp.ne.s32.totalorder %s139, %s140
      %p152 = scmp.eq.s32.totalorder %s25, 3
      %p153 = por %p151, %p152
      %p155 = scmp.ne.s32.totalorder %s140, %s154
      %p156 = scmp.eq.s32.totalorder %s25, 0
      %p157 = por %p155, %p156
      %s159 = sadd.s32 %s158, 1
      %p162 = scmp.eq.s32.totalorder %s19, 3
      %p163 = scmp.ne.s32.totalorder %s158, %s160
      %p164 = scmp.eq.s32.totalorder %s19, 0
      %p165 = por %p163, %p164
      %p166 = scmp.ne.s32.totalorder %s158, %s160
      %p167 = scmp.eq.s32.totalorder %s24, 3
      %p168 = por %p166, %p167
      %p169 = scmp.ne.s32.totalorder %s160, %s161
      %p170 = scmp.eq.s32.totalorder %s24, 0
      %p171 = por %p169, %p170
      %p172 = scmp.ne.s32.totalorder %s160, %s161
      %p173 = scmp.eq.s32.totalorder %s25, 3
      %p174 = por %p172, %p173
      %p176 = scmp.ne.s32.totalorder %s161, %s175
      %p177 = scmp.eq.s32.totalorder %s25, 0
      %p178 = por %p176, %p177
      %s180 = sadd.s32 %s179, 1
      %p183 = scmp.eq.s32.totalorder %s19, 3
      %p184 = scmp.ne.s32.totalorder %s179, %s181
      %p185 = scmp.eq.s32.totalorder %s19, 0
      %p186 = por %p184, %p185
      %p187 = scmp.ne.s32.totalorder %s179, %s181
      %p188 = scmp.eq.s32.totalorder %s24, 3
      %p189 = por %p187, %p188
      %p190 = scmp.ne.s32.totalorder %s181, %s182
      %p191 = scmp.eq.s32.totalorder %s24, 0
      %p192 = por %p190, %p191
      %p193 = scmp.ne.s32.totalorder %s181, %s182
      %p194 = scmp.eq.s32.totalorder %s25, 3
      %p195 = por %p193, %p194
      %p197 = scmp.ne.s32.totalorder %s182, %s196
      %p198 = scmp.eq.s32.totalorder %s25, 0
      %p199 = por %p197, %p198
      %s201 = sadd.s32 %s200, 1
      %p204 = scmp.eq.s32.totalorder %s19, 3
      %p205 = scmp.ne.s32.totalorder %s200, %s202
      %p206 = scmp.eq.s32.totalorder %s19, 0
      %p207 = por %p205, %p206
      %p208 = scmp.ne.s32.totalorder %s200, %s202
      %p209 = scmp.eq.s32.totalorder %s24, 3
      %p210 = por %p208, %p209
      %p211 = scmp.ne.s32.totalorder %s202, %s203
      %p212 = scmp.eq.s32.totalorder %s24, 0
      %p213 = por %p211, %p212
      %p214 = scmp.ne.s32.totalorder %s202, %s203
      %p215 = scmp.eq.s32.totalorder %s25, 3
      %p216 = por %p214, %p215
      %p218 = scmp.ne.s32.totalorder %s203, %s217
      %p219 = scmp.eq.s32.totalorder %s25, 0
      %p220 = por %p218, %p219
      %s222 = sadd.s32 %s221, 1
      %p225 = scmp.eq.s32.totalorder %s19, 3
      %p226 = scmp.ne.s32.totalorder %s221, %s223
      %p227 = scmp.eq.s32.totalorder %s19, 0
      %p228 = por %p226, %p227
      %p229 = scmp.ne.s32.totalorder %s221, %s223
      %p230 = scmp.eq.s32.totalorder %s24, 3
      %p231 = por %p229, %p230
      %p232 = scmp.ne.s32.totalorder %s223, %s224
      %p233 = scmp.eq.s32.totalorder %s24, 0
      %p234 = por %p232, %p233
      %p235 = scmp.ne.s32.totalorder %s223, %s224
      %p236 = scmp.eq.s32.totalorder %s25, 3
      %p237 = por %p235, %p236
      %p239 = scmp.ne.s32.totalorder %s224, %s238
      %p240 = scmp.eq.s32.totalorder %s25, 0
      %p241 = por %p239, %p240
      %s243 = sadd.s32 %s242, 1
      %p246 = scmp.eq.s32.totalorder %s19, 3
      %p247 = scmp.ne.s32.totalorder %s242, %s244
      %p248 = scmp.eq.s32.totalorder %s19, 0
      %p249 = por %p247, %p248
      %p250 = scmp.ne.s32.totalorder %s242, %s244
      %p251 = scmp.eq.s32.totalorder %s24, 3
      %p252 = por %p250, %p251
      %p253 = scmp.ne.s32.totalorder %s244, %s245
      %p254 = scmp.eq.s32.totalorder %s24, 0
      %p255 = por %p253, %p254
      %p256 = scmp.ne.s32.totalorder %s244, %s245
      %p257 = scmp.eq.s32.totalorder %s25, 3
      %p258 = por %p256, %p257
      %p260 = scmp.ne.s32.totalorder %s245, %s259
      %p261 = scmp.eq.s32.totalorder %s25, 0
      %p262 = por %p260, %p261
      %s263 = ssub.s32 %s26, %s38
      %s264 = ssub.s32 %s27, %s34
      %s265 = sor.u32 %s263, %s264
      %p266 = scmp.eq.s32.totalorder %s265, 0
      %s268 = sadd.s32 %s267, 1
      %s269 = scalar_select %p266, %s267, %s268
      %p272 = pneg %p266
      %p273 = scmp.eq.s32.totalorder %s19, 3
      %p274 = por %p272, %p273
      %p275 = scmp.ne.s32.totalorder %s267, %s270
      %p276 = scmp.eq.s32.totalorder %s19, 0
      %p277 = por %p275, %p276
      %p278 = scmp.ne.s32.totalorder %s267, %s270
      %p279 = scmp.eq.s32.totalorder %s24, 3
      %p280 = por %p278, %p279
      %p281 = scmp.ne.s32.totalorder %s270, %s271
      %p282 = scmp.eq.s32.totalorder %s24, 0
      %p283 = por %p281, %p282
      %p284 = scmp.ne.s32.totalorder %s270, %s271
      %p285 = scmp.eq.s32.totalorder %s25, 3
      %p286 = por %p284, %p285
      %p288 = scmp.ne.s32.totalorder %s271, %s287
      %p289 = scmp.eq.s32.totalorder %s25, 0
      %p290 = por %p288, %p289
      %p291 = scmp.le.s32.totalorder 1, %s19
      %p292 = scmp.lt.s32.totalorder %s19, 5
      %p293 = pnand %p291, %p292
      %p294 = pneg %p293
      // Predicated region
      $region9: #{tpu_custom_call.1} parent=5 // pred_check
        _
      $region10: #{tpu_custom_call.1} parent=5 // pred_check_branch
        %296 = sbr.rel (%p293) target = $region12
      $region11: #{tpu_custom_call.1} parent=5 // pred_region
        %s297 = ssub.s32 %s19, 1
        // Predicated region
        $region13: #{tpu_custom_call.1} parent=11 // pred_check
          %p298 = pneg %p108
        $region14: #{tpu_custom_call.1} parent=11 // pred_check_branch
          %300 = sbr.rel (%p298) target = $region16
        $region15: #{tpu_custom_call.1} parent=11 // pred_region
          _
        $region16: #{tpu_custom_call.1} parent=11 // pred_fallthru
          _
        // Predicated region
        $region17: #{tpu_custom_call.1} parent=11 // pred_check
          %p301 = pneg %p129
        $region18: #{tpu_custom_call.1} parent=11 // pred_check_branch
          %303 = sbr.rel (%p301) target = $region20
        $region19: #{tpu_custom_call.1} parent=11 // pred_region
          _
        $region20: #{tpu_custom_call.1} parent=11 // pred_fallthru
          _
        // Predicated region
        $region21: #{tpu_custom_call.1} parent=11 // pred_check
          %p304 = pneg %p150
        $region22: #{tpu_custom_call.1} parent=11 // pred_check_branch
          %306 = sbr.rel (%p304) target = $region24
        $region23: #{tpu_custom_call.1} parent=11 // pred_region
          _
        $region24: #{tpu_custom_call.1} parent=11 // pred_fallthru
          _
        // Predicated region
        $region25: #{tpu_custom_call.1} parent=11 // pred_check
          %p307 = pneg %p171
        $region26: #{tpu_custom_call.1} parent=11 // pred_check_branch
          %309 = sbr.rel (%p307) target = $region28
        $region27: #{tpu_custom_call.1} parent=11 // pred_region
          _
        $region28: #{tpu_custom_call.1} parent=11 // pred_fallthru
          _
        // Predicated region
        $region29: #{tpu_custom_call.1} parent=11 // pred_check
          %p310 = pneg %p192
        $region30: #{tpu_custom_call.1} parent=11 // pred_check_branch
          %312 = sbr.rel (%p310) target = $region32
        $region31: #{tpu_custom_call.1} parent=11 // pred_region
          _
        $region32: #{tpu_custom_call.1} parent=11 // pred_fallthru
          _
        // Predicated region
        $region33: #{tpu_custom_call.1} parent=11 // pred_check
          %p313 = pneg %p213
        $region34: #{tpu_custom_call.1} parent=11 // pred_check_branch
          %315 = sbr.rel (%p313) target = $region36
        $region35: #{tpu_custom_call.1} parent=11 // pred_region
          _
        $region36: #{tpu_custom_call.1} parent=11 // pred_fallthru
          _
        // Predicated region
        $region37: #{tpu_custom_call.1} parent=11 // pred_check
          %p316 = pneg %p234
        $region38: #{tpu_custom_call.1} parent=11 // pred_check_branch
          %318 = sbr.rel (%p316) target = $region40
        $region39: #{tpu_custom_call.1} parent=11 // pred_region
          _
        $region40: #{tpu_custom_call.1} parent=11 // pred_fallthru
          _
        // Predicated region
        $region41: #{tpu_custom_call.1} parent=11 // pred_check
          %p319 = pneg %p255
        $region42: #{tpu_custom_call.1} parent=11 // pred_check_branch
          %321 = sbr.rel (%p319) target = $region44
        $region43: #{tpu_custom_call.1} parent=11 // pred_region
          _
        $region44: #{tpu_custom_call.1} parent=11 // pred_fallthru
          _
      $region12: #{tpu_custom_call.1} parent=5 // pred_fallthru
        _
      %p322 = scmp.lt.s32.totalorder %s19, 4
      // Predicated region
      $region45: #{tpu_custom_call.1} parent=5 // pred_check
        %p323 = pneg %p322
      $region46: #{tpu_custom_call.1} parent=5 // pred_check_branch
        %325 = sbr.rel (%p323) target = $region48
      $region47: #{tpu_custom_call.1} parent=5 // pred_region
        // Predicated region
        $region49: #{tpu_custom_call.1} parent=47 // pred_check
          %p326 = pneg %p55
        $region50: #{tpu_custom_call.1} parent=47 // pred_check_branch
          %328 = sbr.rel (%p326) target = $region52
        $region51: #{tpu_custom_call.1} parent=47 // pred_region
          %s329 = smul.u32 %s26, 2
          %s330 = sadd.s32 %s329, %s27
          %p331 = scmp.lt.s32.totalorder %s330, 3
          %s332 = scalar_select %p331, %s330, 3
          %s333 = smul.addr %s332, 40
          %s334 = smul.addr %s333, 8
          %s335 = scalar_lea.vmem %s0, %s334
          %s336 = smul.u32 %s26, 2
          %s337 = sadd.s32 %s336, %s27
        $region52: #{tpu_custom_call.1} parent=47 // pred_fallthru
          _
        // Predicated region
        $region53: #{tpu_custom_call.1} parent=47 // pred_check
          %p338 = pneg %p81
        $region54: #{tpu_custom_call.1} parent=47 // pred_check_branch
          %340 = sbr.rel (%p338) target = $region56
        $region55: #{tpu_custom_call.1} parent=47 // pred_region
          %p341 = scmp.lt.s32.totalorder %s27, 1
          %s342 = scalar_select %p341, %s27, 1
          %s343 = smul.addr %s342, 40
          %s344 = smul.addr %s343, 8
          %s345 = scalar_lea.vmem %s1, %s344
        $region56: #{tpu_custom_call.1} parent=47 // pred_fallthru
          _
      $region48: #{tpu_custom_call.1} parent=5 // pred_fallthru
        _
      %p346 = scmp.le.s32.totalorder 1, %s19
      %p347 = scmp.lt.s32.totalorder %s19, 5
      %p348 = pnand %p346, %p347
      %p349 = pneg %p348
      // Predicated region
      $region57: #{tpu_custom_call.1} parent=5 // pred_check
        _
      $region58: #{tpu_custom_call.1} parent=5 // pred_check_branch
        %351 = sbr.rel (%p348) target = $region60
      $region59: #{tpu_custom_call.1} parent=5 // pred_region
        %s352 = ssub.s32 %s19, 1
        %s353 = smul.u32 %s28, 2
        %s354 = sadd.s32 %s353, %s29
        %p355 = scmp.lt.s32.totalorder %s354, 3
        %s356 = scalar_select %p355, %s354, 3
        %s357 = smul.addr %s356, 40
        %s358 = smul.addr %s357, 8
        %s359 = scalar_lea.vmem %s0, %s358
        %p360 = pneg %p61
        %p361 = pneg %p58
        %p362 = scmp.lt.s32.totalorder %s29, 1
        %s363 = scalar_select %p362, %s29, 1
        %s364 = smul.addr %s363, 40
        %s365 = smul.addr %s364, 8
        %s366 = scalar_lea.vmem %s1, %s365
        %p367 = pneg %p87
        %p368 = pneg %p84
        %p369 = pneg %p108
        %p370 = pneg %p105
        %p371 = pneg %p129
        %p372 = pneg %p126
        %p373 = pneg %p150
        %p374 = pneg %p147
        %p375 = pneg %p171
        %p376 = pneg %p168
        %p377 = pneg %p192
        %p378 = pneg %p189
        %p379 = pneg %p213
        %p380 = pneg %p210
        %p381 = pneg %p234
        %p382 = pneg %p231
        %p383 = pneg %p255
        %p384 = pneg %p252
        %p385 = pneg %p283
        %p386 = pneg %p280
        %s387 = sand.u32 %s270, 1
        %s388 = scalar_lea.sflag [#allocation3], %s387
        %s389 = sand.u32 %s270, 1
        %s390 = smul.addr %s389, 32
        %s391 = scalar_lea.vmem [#allocation2], %s390
        %s392 = smul.u32 %s28, 2
        %s393 = sadd.s32 %s392, %s29
        %p394 = scmp.lt.s32.totalorder %s393, 3
        %s395 = scalar_select %p394, %s393, 3
        %s396 = smul.addr %s395, 40
        %s397 = smul.addr %s396, 8
        %s398 = scalar_lea.vmem %s0, %s397
        %s399 = smul.u32 %s28, 2
        %s400 = sadd.s32 %s399, %s29
        %p401 = scmp.lt.s32.totalorder %s29, 1
        %s402 = scalar_select %p401, %s29, 1
        %s403 = smul.addr %s402, 40
        %s404 = smul.addr %s403, 8
        %s405 = scalar_lea.vmem %s1, %s404
        %s406 = smul.u32 4, %s29
        %v407 = vld [vmem:[%s3] sm:$0x1]
        %v408 = vld [vmem:[%s4] sm:$0x1]
        %v409 = vld [vmem:[%s398] sm:$0xff]
        %v410 = vld [vmem:[%s398 + $0x8] sm:$0x1]
        %v411 = vld [vmem:[%s398 + $0x10] sm:$0xff]
        %v412 = vld [vmem:[%s398 + $0x18] sm:$0x1]
        %v413 = vld [vmem:[%s398 + $0x20] sm:$0xff]
        %v414 = vld [vmem:[%s398 + $0x28] sm:$0x1]
        %v415 = vld [vmem:[%s398 + $0x30] sm:$0xff]
        %v416 = vld [vmem:[%s398 + $0x38] sm:$0x1]
        %v417 = vld [vmem:[%s398 + $0x40] sm:$0xff]
        %v418 = vld [vmem:[%s398 + $0x48] sm:$0x1]
        %v419 = vld [vmem:[%s2] sm:$0x1]
        %421 = vset.pattern.permute.xlu0 0
        %422 = vperm.xlu0 %421, %v409
        %v423 = vpop.permute.xlu0 %422
        %426 = vset.pattern.permute.xlu0 0
        %427 = vperm.xlu0 %426, %v410
        %v428 = vpop.permute.xlu0 %427
        %431 = vset.pattern.permute.xlu0 0
        %432 = vperm.xlu0 %431, %v411
        %v433 = vpop.permute.xlu0 %432
        %436 = vset.pattern.permute.xlu0 0
        %437 = vperm.xlu0 %436, %v412
        %v438 = vpop.permute.xlu0 %437
        %441 = vset.pattern.permute.xlu0 0
        %442 = vperm.xlu0 %441, %v413
        %v443 = vpop.permute.xlu0 %442
        %446 = vset.pattern.permute.xlu0 0
        %447 = vperm.xlu0 %446, %v414
        %v448 = vpop.permute.xlu0 %447
        %451 = vset.pattern.permute.xlu0 0
        %452 = vperm.xlu0 %451, %v415
        %v453 = vpop.permute.xlu0 %452
        %456 = vset.pattern.permute.xlu0 0
        %457 = vperm.xlu0 %456, %v416
        %v458 = vpop.permute.xlu0 %457
        %461 = vset.pattern.permute.xlu0 0
        %462 = vperm.xlu0 %461, %v417
        %v463 = vpop.permute.xlu0 %462
        %466 = vset.pattern.permute.xlu0 0
        %467 = vperm.xlu0 %466, %v418
        %v468 = vpop.permute.xlu0 %467
        %v470 = vlaneseq
        %v471 = vshrl.u32 %v470, 7
        %v472 = vsub.s32 0, %v471
        %v473 = vrot.slane %v419, %v472
        %v474 = vmul.f32 %v423, %v473
        %v475 = vmul.f32 %v428, %v473
        %v476 = vmul.f32 %v433, %v473
        %v477 = vmul.f32 %v438, %v473
        %v478 = vmul.f32 %v443, %v473
        %v479 = vmul.f32 %v448, %v473
        %v480 = vmul.f32 %v453, %v473
        %v481 = vmul.f32 %v458, %v473
        %v482 = vmul.f32 %v463, %v473
        %v483 = vmul.f32 %v468, %v473
        %v484 = vld [vmem:[%s2 + $0x1] sm:$0x1]
        %485 = vset.pattern.permute.xlu0 1
        %486 = vperm.xlu0 %485, %v409
        %v487 = vpop.permute.xlu0 %486
        %489 = vset.pattern.permute.xlu0 1
        %490 = vperm.xlu0 %489, %v410
        %v491 = vpop.permute.xlu0 %490
        %493 = vset.pattern.permute.xlu0 1
        %494 = vperm.xlu0 %493, %v411
        %v495 = vpop.permute.xlu0 %494
        %497 = vset.pattern.permute.xlu0 1
        %498 = vperm.xlu0 %497, %v412
        %v499 = vpop.permute.xlu0 %498
        %501 = vset.pattern.permute.xlu0 1
        %502 = vperm.xlu0 %501, %v413
        %v503 = vpop.permute.xlu0 %502
        %505 = vset.pattern.permute.xlu0 1
        %506 = vperm.xlu0 %505, %v414
        %v507 = vpop.permute.xlu0 %506
        %509 = vset.pattern.permute.xlu0 1
        %510 = vperm.xlu0 %509, %v415
        %v511 = vpop.permute.xlu0 %510
        %513 = vset.pattern.permute.xlu0 1
        %514 = vperm.xlu0 %513, %v416
        %v515 = vpop.permute.xlu0 %514
        %517 = vset.pattern.permute.xlu0 1
        %518 = vperm.xlu0 %517, %v417
        %v519 = vpop.permute.xlu0 %518
        %521 = vset.pattern.permute.xlu0 1
        %522 = vperm.xlu0 %521, %v418
        %v523 = vpop.permute.xlu0 %522
        %v525 = vlaneseq
        %v526 = vshrl.u32 %v525, 7
        %v527 = vsub.s32 0, %v526
        %v528 = vrot.slane %v484, %v527
        %v529 = vmul.f32 %v487, %v528
        %v530 = vmul.f32 %v491, %v528
        %v531 = vmul.f32 %v495, %v528
        %v532 = vmul.f32 %v499, %v528
        %v533 = vmul.f32 %v503, %v528
        %v534 = vmul.f32 %v507, %v528
        %v535 = vmul.f32 %v511, %v528
        %v536 = vmul.f32 %v515, %v528
        %v537 = vmul.f32 %v519, %v528
        %v538 = vmul.f32 %v523, %v528
        %v539 = vadd.f32 %v474, %v529
        %v540 = vadd.f32 %v475, %v530
        %v541 = vadd.f32 %v476, %v531
        %v542 = vadd.f32 %v477, %v532
        %v543 = vadd.f32 %v478, %v533
        %v544 = vadd.f32 %v479, %v534
        %v545 = vadd.f32 %v480, %v535
        %v546 = vadd.f32 %v481, %v536
        %v547 = vadd.f32 %v482, %v537
        %v548 = vadd.f32 %v483, %v538
        %v549 = vld [vmem:[%s2 + $0x2] sm:$0x1]
        %550 = vset.pattern.permute.xlu0 2
        %551 = vperm.xlu0 %550, %v409
        %v552 = vpop.permute.xlu0 %551
        %554 = vset.pattern.permute.xlu0 2
        %555 = vperm.xlu0 %554, %v410
        %v556 = vpop.permute.xlu0 %555
        %558 = vset.pattern.permute.xlu0 2
        %559 = vperm.xlu0 %558, %v411
        %v560 = vpop.permute.xlu0 %559
        %562 = vset.pattern.permute.xlu0 2
        %563 = vperm.xlu0 %562, %v412
        %v564 = vpop.permute.xlu0 %563
        %566 = vset.pattern.permute.xlu0 2
        %567 = vperm.xlu0 %566, %v413
        %v568 = vpop.permute.xlu0 %567
        %570 = vset.pattern.permute.xlu0 2
        %571 = vperm.xlu0 %570, %v414
        %v572 = vpop.permute.xlu0 %571
        %574 = vset.pattern.permute.xlu0 2
        %575 = vperm.xlu0 %574, %v415
        %v576 = vpop.permute.xlu0 %575
        %578 = vset.pattern.permute.xlu0 2
        %579 = vperm.xlu0 %578, %v416
        %v580 = vpop.permute.xlu0 %579
        %582 = vset.pattern.permute.xlu0 2
        %583 = vperm.xlu0 %582, %v417
        %v584 = vpop.permute.xlu0 %583
        %586 = vset.pattern.permute.xlu0 2
        %587 = vperm.xlu0 %586, %v418
        %v588 = vpop.permute.xlu0 %587
        %v590 = vlaneseq
        %v591 = vshrl.u32 %v590, 7
        %v592 = vsub.s32 0, %v591
        %v593 = vrot.slane %v549, %v592
        %v594 = vmul.f32 %v552, %v593
        %v595 = vmul.f32 %v556, %v593
        %v596 = vmul.f32 %v560, %v593
        %v597 = vmul.f32 %v564, %v593
        %v598 = vmul.f32 %v568, %v593
        %v599 = vmul.f32 %v572, %v593
        %v600 = vmul.f32 %v576, %v593
        %v601 = vmul.f32 %v580, %v593
        %v602 = vmul.f32 %v584, %v593
        %v603 = vmul.f32 %v588, %v593
        %v604 = vadd.f32 %v539, %v594
        %v605 = vadd.f32 %v540, %v595
        %v606 = vadd.f32 %v541, %v596
        %v607 = vadd.f32 %v542, %v597
        %v608 = vadd.f32 %v543, %v598
        %v609 = vadd.f32 %v544, %v599
        %v610 = vadd.f32 %v545, %v600
        %v611 = vadd.f32 %v546, %v601
        %v612 = vadd.f32 %v547, %v602
        %v613 = vadd.f32 %v548, %v603
        %v614 = vld [vmem:[%s2 + $0x3] sm:$0x1]
        %615 = vset.pattern.permute.xlu0 3
        %616 = vperm.xlu0 %615, %v409
        %v617 = vpop.permute.xlu0 %616
        %619 = vset.pattern.permute.xlu0 3
        %620 = vperm.xlu0 %619, %v410
        %v621 = vpop.permute.xlu0 %620
        %623 = vset.pattern.permute.xlu0 3
        %624 = vperm.xlu0 %623, %v411
        %v625 = vpop.permute.xlu0 %624
        %627 = vset.pattern.permute.xlu0 3
        %628 = vperm.xlu0 %627, %v412
        %v629 = vpop.permute.xlu0 %628
        %631 = vset.pattern.permute.xlu0 3
        %632 = vperm.xlu0 %631, %v413
        %v633 = vpop.permute.xlu0 %632
        %635 = vset.pattern.permute.xlu0 3
        %636 = vperm.xlu0 %635, %v414
        %v637 = vpop.permute.xlu0 %636
        %639 = vset.pattern.permute.xlu0 3
        %640 = vperm.xlu0 %639, %v415
        %v641 = vpop.permute.xlu0 %640
        %643 = vset.pattern.permute.xlu0 3
        %644 = vperm.xlu0 %643, %v416
        %v645 = vpop.permute.xlu0 %644
        %647 = vset.pattern.permute.xlu0 3
        %648 = vperm.xlu0 %647, %v417
        %v649 = vpop.permute.xlu0 %648
        %651 = vset.pattern.permute.xlu0 3
        %652 = vperm.xlu0 %651, %v418
        %v653 = vpop.permute.xlu0 %652
        %v655 = vlaneseq
        %v656 = vshrl.u32 %v655, 7
        %v657 = vsub.s32 0, %v656
        %v658 = vrot.slane %v614, %v657
        %v659 = vmul.f32 %v617, %v658
        %v660 = vmul.f32 %v621, %v658
        %v661 = vmul.f32 %v625, %v658
        %v662 = vmul.f32 %v629, %v658
        %v663 = vmul.f32 %v633, %v658
        %v664 = vmul.f32 %v637, %v658
        %v665 = vmul.f32 %v641, %v658
        %v666 = vmul.f32 %v645, %v658
        %v667 = vmul.f32 %v649, %v658
        %v668 = vmul.f32 %v653, %v658
        %v669 = vadd.f32 %v604, %v659
        %v670 = vadd.f32 %v605, %v660
        %v671 = vadd.f32 %v606, %v661
        %v672 = vadd.f32 %v607, %v662
        %v673 = vadd.f32 %v608, %v663
        %v674 = vadd.f32 %v609, %v664
        %v675 = vadd.f32 %v610, %v665
        %v676 = vadd.f32 %v611, %v666
        %v677 = vadd.f32 %v612, %v667
        %v678 = vadd.f32 %v613, %v668
        %v680 = vlaneseq
        %v681 = vshrl.u32 %v680, 7
        %v682 = vsub.s32 0, %v681
        %v683 = vrot.slane %v407, %v682
        %v685 = vadd.f32 %v669, %v683
        %v686 = vadd.f32 %v670, %v683
        %v687 = vadd.f32 %v671, %v683
        %v688 = vadd.f32 %v672, %v683
        %v689 = vadd.f32 %v673, %v683
        %v690 = vadd.f32 %v674, %v683
        %v691 = vadd.f32 %v675, %v683
        %v692 = vadd.f32 %v676, %v683
        %v693 = vadd.f32 %v677, %v683
        %v694 = vadd.f32 %v678, %v683
        %vm695 = vcmp.gt.f32.partialorder %v685, 0.0
        %vm696 = vcmp.gt.f32.partialorder %v686, 0.0
        %vm697 = vcmp.gt.f32.partialorder %v687, 0.0
        %vm698 = vcmp.gt.f32.partialorder %v688, 0.0
        %vm699 = vcmp.gt.f32.partialorder %v689, 0.0
        %vm700 = vcmp.gt.f32.partialorder %v690, 0.0
        %vm701 = vcmp.gt.f32.partialorder %v691, 0.0
        %vm702 = vcmp.gt.f32.partialorder %v692, 0.0
        %vm703 = vcmp.gt.f32.partialorder %v693, 0.0
        %vm704 = vcmp.gt.f32.partialorder %v694, 0.0
        %v706 = vlaneseq
        %v707 = vshrl.u32 %v706, 7
        %v708 = vsub.s32 0, %v707
        %v709 = vrot.slane %v408, %v708
        %v711 = vmul.f32 %v685, %v709
        %v712 = vmul.f32 %v686, %v709
        %v713 = vmul.f32 %v687, %v709
        %v714 = vmul.f32 %v688, %v709
        %v715 = vmul.f32 %v689, %v709
        %v716 = vmul.f32 %v690, %v709
        %v717 = vmul.f32 %v691, %v709
        %v718 = vmul.f32 %v692, %v709
        %v719 = vmul.f32 %v693, %v709
        %v720 = vmul.f32 %v694, %v709
        %v721 = vsel %vm695, %v685, %v711
        %v722 = vsel %vm696, %v686, %v712
        %v723 = vsel %vm697, %v687, %v713
        %v724 = vsel %vm698, %v688, %v714
        %v725 = vsel %vm699, %v689, %v715
        %v726 = vsel %vm700, %v690, %v716
        %v727 = vsel %vm701, %v691, %v717
        %v728 = vsel %vm702, %v692, %v718
        %v729 = vsel %vm703, %v693, %v719
        %v730 = vsel %vm704, %v694, %v720
        %v731 = vld [vmem:[%s405] sm:$0xff]
        %v732 = vld [vmem:[%s405 + $0x8] sm:$0x1]
        %v733 = vld [vmem:[%s405 + $0x10] sm:$0xff]
        %v734 = vld [vmem:[%s405 + $0x18] sm:$0x1]
        %v735 = vld [vmem:[%s405 + $0x20] sm:$0xff]
        %v736 = vld [vmem:[%s405 + $0x28] sm:$0x1]
        %v737 = vld [vmem:[%s405 + $0x30] sm:$0xff]
        %v738 = vld [vmem:[%s405 + $0x38] sm:$0x1]
        %v739 = vld [vmem:[%s405 + $0x40] sm:$0xff]
        %v740 = vld [vmem:[%s405 + $0x48] sm:$0x1]
        %742 = vset.pattern.permute.xlu0 0
        %743 = vperm.xlu0 %742, %v731
        %v744 = vpop.permute.xlu0 %743
        %747 = vset.pattern.permute.xlu0 0
        %748 = vperm.xlu0 %747, %v732
        %v749 = vpop.permute.xlu0 %748
        %752 = vset.pattern.permute.xlu0 0
        %753 = vperm.xlu0 %752, %v733
        %v754 = vpop.permute.xlu0 %753
        %757 = vset.pattern.permute.xlu0 0
        %758 = vperm.xlu0 %757, %v734
        %v759 = vpop.permute.xlu0 %758
        %762 = vset.pattern.permute.xlu0 0
        %763 = vperm.xlu0 %762, %v735
        %v764 = vpop.permute.xlu0 %763
        %767 = vset.pattern.permute.xlu0 0
        %768 = vperm.xlu0 %767, %v736
        %v769 = vpop.permute.xlu0 %768
        %772 = vset.pattern.permute.xlu0 0
        %773 = vperm.xlu0 %772, %v737
        %v774 = vpop.permute.xlu0 %773
        %777 = vset.pattern.permute.xlu0 0
        %778 = vperm.xlu0 %777, %v738
        %v779 = vpop.permute.xlu0 %778
        %782 = vset.pattern.permute.xlu0 0
        %783 = vperm.xlu0 %782, %v739
        %v784 = vpop.permute.xlu0 %783
        %787 = vset.pattern.permute.xlu0 0
        %788 = vperm.xlu0 %787, %v740
        %v789 = vpop.permute.xlu0 %788
        %v791 = vmul.f32 %v721, %v744
        %v792 = vmul.f32 %v722, %v749
        %v793 = vmul.f32 %v723, %v754
        %v794 = vmul.f32 %v724, %v759
        %v795 = vmul.f32 %v725, %v764
        %v796 = vmul.f32 %v726, %v769
        %v797 = vmul.f32 %v727, %v774
        %v798 = vmul.f32 %v728, %v779
        %v799 = vmul.f32 %v729, %v784
        %v800 = vmul.f32 %v730, %v789
        %s801 = scalar_lea.vmem %s398, 80
        %v802 = vld [vmem:[%s801] sm:$0xff]
        %v803 = vld [vmem:[%s801 + $0x10] sm:$0xff]
        %v804 = vld [vmem:[%s801 + $0x20] sm:$0xff]
        %v805 = vld [vmem:[%s801 + $0x30] sm:$0xff]
        %v806 = vld [vmem:[%s801 + $0x40] sm:$0xff]
        %808 = vset.pattern.permute.xlu0 0
        %809 = vperm.xlu0 %808, %v802
        %v810 = vpop.permute.xlu0 %809
        %813 = vset.pattern.permute.xlu0 0
        %814 = vperm.xlu0 %813, %v803
        %v815 = vpop.permute.xlu0 %814
        %818 = vset.pattern.permute.xlu0 0
        %819 = vperm.xlu0 %818, %v804
        %v820 = vpop.permute.xlu0 %819
        %823 = vset.pattern.permute.xlu0 0
        %824 = vperm.xlu0 %823, %v805
        %v825 = vpop.permute.xlu0 %824
        %828 = vset.pattern.permute.xlu0 0
        %829 = vperm.xlu0 %828, %v806
        %v830 = vpop.permute.xlu0 %829
        %v832 = vmul.f32 %v810, %v473
        %v833 = vmul.f32 %v815, %v473
        %v834 = vmul.f32 %v820, %v473
        %v835 = vmul.f32 %v825, %v473
        %v836 = vmul.f32 %v830, %v473
        %837 = vset.pattern.permute.xlu0 1
        %838 = vperm.xlu0 %837, %v802
        %v839 = vpop.permute.xlu0 %838
        %841 = vset.pattern.permute.xlu0 1
        %842 = vperm.xlu0 %841, %v803
        %v843 = vpop.permute.xlu0 %842
        %845 = vset.pattern.permute.xlu0 1
        %846 = vperm.xlu0 %845, %v804
        %v847 = vpop.permute.xlu0 %846
        %849 = vset.pattern.permute.xlu0 1
        %850 = vperm.xlu0 %849, %v805
        %v851 = vpop.permute.xlu0 %850
        %853 = vset.pattern.permute.xlu0 1
        %854 = vperm.xlu0 %853, %v806
        %v855 = vpop.permute.xlu0 %854
        %v857 = vmul.f32 %v839, %v528
        %v858 = vmul.f32 %v843, %v528
        %v859 = vmul.f32 %v847, %v528
        %v860 = vmul.f32 %v851, %v528
        %v861 = vmul.f32 %v855, %v528
        %v862 = vadd.f32 %v832, %v857
        %v863 = vadd.f32 %v833, %v858
        %v864 = vadd.f32 %v834, %v859
        %v865 = vadd.f32 %v835, %v860
        %v866 = vadd.f32 %v836, %v861
        %867 = vset.pattern.permute.xlu0 2
        %868 = vperm.xlu0 %867, %v802
        %v869 = vpop.permute.xlu0 %868
        %871 = vset.pattern.permute.xlu0 2
        %872 = vperm.xlu0 %871, %v803
        %v873 = vpop.permute.xlu0 %872
        %875 = vset.pattern.permute.xlu0 2
        %876 = vperm.xlu0 %875, %v804
        %v877 = vpop.permute.xlu0 %876
        %879 = vset.pattern.permute.xlu0 2
        %880 = vperm.xlu0 %879, %v805
        %v881 = vpop.permute.xlu0 %880
        %883 = vset.pattern.permute.xlu0 2
        %884 = vperm.xlu0 %883, %v806
        %v885 = vpop.permute.xlu0 %884
        %v887 = vmul.f32 %v869, %v593
        %v888 = vmul.f32 %v873, %v593
        %v889 = vmul.f32 %v877, %v593
        %v890 = vmul.f32 %v881, %v593
        %v891 = vmul.f32 %v885, %v593
        %v892 = vadd.f32 %v862, %v887
        %v893 = vadd.f32 %v863, %v888
        %v894 = vadd.f32 %v864, %v889
        %v895 = vadd.f32 %v865, %v890
        %v896 = vadd.f32 %v866, %v891
        %897 = vset.pattern.permute.xlu0 3
        %898 = vperm.xlu0 %897, %v802
        %v899 = vpop.permute.xlu0 %898
        %901 = vset.pattern.permute.xlu0 3
        %902 = vperm.xlu0 %901, %v803
        %v903 = vpop.permute.xlu0 %902
        %905 = vset.pattern.permute.xlu0 3
        %906 = vperm.xlu0 %905, %v804
        %v907 = vpop.permute.xlu0 %906
        %909 = vset.pattern.permute.xlu0 3
        %910 = vperm.xlu0 %909, %v805
        %v911 = vpop.permute.xlu0 %910
        %913 = vset.pattern.permute.xlu0 3
        %914 = vperm.xlu0 %913, %v806
        %v915 = vpop.permute.xlu0 %914
        %v917 = vmul.f32 %v899, %v658
        %v918 = vmul.f32 %v903, %v658
        %v919 = vmul.f32 %v907, %v658
        %v920 = vmul.f32 %v911, %v658
        %v921 = vmul.f32 %v915, %v658
        %v922 = vadd.f32 %v892, %v917
        %v923 = vadd.f32 %v893, %v918
        %v924 = vadd.f32 %v894, %v919
        %v925 = vadd.f32 %v895, %v920
        %v926 = vadd.f32 %v896, %v921
        %v927 = vadd.f32 %v922, %v683
        %v928 = vadd.f32 %v923, %v683
        %v929 = vadd.f32 %v924, %v683
        %v930 = vadd.f32 %v925, %v683
        %v931 = vadd.f32 %v926, %v683
        %vm932 = vcmp.gt.f32.partialorder %v927, 0.0
        %vm933 = vcmp.gt.f32.partialorder %v928, 0.0
        %vm934 = vcmp.gt.f32.partialorder %v929, 0.0
        %vm935 = vcmp.gt.f32.partialorder %v930, 0.0
        %vm936 = vcmp.gt.f32.partialorder %v931, 0.0
        %v937 = vmul.f32 %v927, %v709
        %v938 = vmul.f32 %v928, %v709
        %v939 = vmul.f32 %v929, %v709
        %v940 = vmul.f32 %v930, %v709
        %v941 = vmul.f32 %v931, %v709
        %v942 = vsel %vm932, %v927, %v937
        %v943 = vsel %vm933, %v928, %v938
        %v944 = vsel %vm934, %v929, %v939
        %v945 = vsel %vm935, %v930, %v940
        %v946 = vsel %vm936, %v931, %v941
        %s947 = scalar_lea.vmem %s405, 80
        %v948 = vld [vmem:[%s947] sm:$0xff]
        %v949 = vld [vmem:[%s947 + $0x10] sm:$0xff]
        %v950 = vld [vmem:[%s947 + $0x20] sm:$0xff]
        %v951 = vld [vmem:[%s947 + $0x30] sm:$0xff]
        %v952 = vld [vmem:[%s947 + $0x40] sm:$0xff]
        %954 = vset.pattern.permute.xlu0 0
        %955 = vperm.xlu0 %954, %v948
        %v956 = vpop.permute.xlu0 %955
        %959 = vset.pattern.permute.xlu0 0
        %960 = vperm.xlu0 %959, %v949
        %v961 = vpop.permute.xlu0 %960
        %964 = vset.pattern.permute.xlu0 0
        %965 = vperm.xlu0 %964, %v950
        %v966 = vpop.permute.xlu0 %965
        %969 = vset.pattern.permute.xlu0 0
        %970 = vperm.xlu0 %969, %v951
        %v971 = vpop.permute.xlu0 %970
        %974 = vset.pattern.permute.xlu0 0
        %975 = vperm.xlu0 %974, %v952
        %v976 = vpop.permute.xlu0 %975
        %v978 = vmul.f32 %v942, %v956
        %v979 = vmul.f32 %v943, %v961
        %v980 = vmul.f32 %v944, %v966
        %v981 = vmul.f32 %v945, %v971
        %v982 = vmul.f32 %v946, %v976
        %s983 = scalar_lea.vmem %s398, 160
        %v984 = vld [vmem:[%s983] sm:$0xff]
        %v985 = vld [vmem:[%s983 + $0x8] sm:$0x1]
        %v986 = vld [vmem:[%s983 + $0x10] sm:$0xff]
        %v987 = vld [vmem:[%s983 + $0x18] sm:$0x1]
        %v988 = vld [vmem:[%s983 + $0x20] sm:$0xff]
        %v989 = vld [vmem:[%s983 + $0x28] sm:$0x1]
        %v990 = vld [vmem:[%s983 + $0x30] sm:$0xff]
        %v991 = vld [vmem:[%s983 + $0x38] sm:$0x1]
        %993 = vset.pattern.permute.xlu0 0
        %994 = vperm.xlu0 %993, %v984
        %v995 = vpop.permute.xlu0 %994
        %998 = vset.pattern.permute.xlu0 0
        %999 = vperm.xlu0 %998, %v985
        %v1000 = vpop.permute.xlu0 %999
        %1003 = vset.pattern.permute.xlu0 0
        %1004 = vperm.xlu0 %1003, %v986
        %v1005 = vpop.permute.xlu0 %1004
        %1008 = vset.pattern.permute.xlu0 0
        %1009 = vperm.xlu0 %1008, %v987
        %v1010 = vpop.permute.xlu0 %1009
        %1013 = vset.pattern.permute.xlu0 0
        %1014 = vperm.xlu0 %1013, %v988
        %v1015 = vpop.permute.xlu0 %1014
        %1018 = vset.pattern.permute.xlu0 0
        %1019 = vperm.xlu0 %1018, %v989
        %v1020 = vpop.permute.xlu0 %1019
        %1023 = vset.pattern.permute.xlu0 0
        %1024 = vperm.xlu0 %1023, %v990
        %v1025 = vpop.permute.xlu0 %1024
        %1028 = vset.pattern.permute.xlu0 0
        %1029 = vperm.xlu0 %1028, %v991
        %v1030 = vpop.permute.xlu0 %1029
        %v1032 = vmul.f32 %v995, %v473
        %v1033 = vmul.f32 %v1000, %v473
        %v1034 = vmul.f32 %v1005, %v473
        %v1035 = vmul.f32 %v1010, %v473
        %v1036 = vmul.f32 %v1015, %v473
        %v1037 = vmul.f32 %v1020, %v473
        %v1038 = vmul.f32 %v1025, %v473
        %v1039 = vmul.f32 %v1030, %v473
        %1040 = vset.pattern.permute.xlu0 1
        %1041 = vperm.xlu0 %1040, %v984
        %v1042 = vpop.permute.xlu0 %1041
        %1044 = vset.pattern.permute.xlu0 1
        %1045 = vperm.xlu0 %1044, %v985
        %v1046 = vpop.permute.xlu0 %1045
        %1048 = vset.pattern.permute.xlu0 1
        %1049 = vperm.xlu0 %1048, %v986
        %v1050 = vpop.permute.xlu0 %1049
        %1052 = vset.pattern.permute.xlu0 1
        %1053 = vperm.xlu0 %1052, %v987
        %v1054 = vpop.permute.xlu0 %1053
        %1056 = vset.pattern.permute.xlu0 1
        %1057 = vperm.xlu0 %1056, %v988
        %v1058 = vpop.permute.xlu0 %1057
        %1060 = vset.pattern.permute.xlu0 1
        %1061 = vperm.xlu0 %1060, %v989
        %v1062 = vpop.permute.xlu0 %1061
        %1064 = vset.pattern.permute.xlu0 1
        %1065 = vperm.xlu0 %1064, %v990
        %v1066 = vpop.permute.xlu0 %1065
        %1068 = vset.pattern.permute.xlu0 1
        %1069 = vperm.xlu0 %1068, %v991
        %v1070 = vpop.permute.xlu0 %1069
        %v1072 = vmul.f32 %v1042, %v528
        %v1073 = vmul.f32 %v1046, %v528
        %v1074 = vmul.f32 %v1050, %v528
        %v1075 = vmul.f32 %v1054, %v528
        %v1076 = vmul.f32 %v1058, %v528
        %v1077 = vmul.f32 %v1062, %v528
        %v1078 = vmul.f32 %v1066, %v528
        %v1079 = vmul.f32 %v1070, %v528
        %v1080 = vadd.f32 %v1032, %v1072
        %v1081 = vadd.f32 %v1033, %v1073
        %v1082 = vadd.f32 %v1034, %v1074
        %v1083 = vadd.f32 %v1035, %v1075
        %v1084 = vadd.f32 %v1036, %v1076
        %v1085 = vadd.f32 %v1037, %v1077
        %v1086 = vadd.f32 %v1038, %v1078
        %v1087 = vadd.f32 %v1039, %v1079
        %1088 = vset.pattern.permute.xlu0 2
        %1089 = vperm.xlu0 %1088, %v984
        %v1090 = vpop.permute.xlu0 %1089
        %1092 = vset.pattern.permute.xlu0 2
        %1093 = vperm.xlu0 %1092, %v985
        %v1094 = vpop.permute.xlu0 %1093
        %1096 = vset.pattern.permute.xlu0 2
        %1097 = vperm.xlu0 %1096, %v986
        %v1098 = vpop.permute.xlu0 %1097
        %1100 = vset.pattern.permute.xlu0 2
        %1101 = vperm.xlu0 %1100, %v987
        %v1102 = vpop.permute.xlu0 %1101
        %1104 = vset.pattern.permute.xlu0 2
        %1105 = vperm.xlu0 %1104, %v988
        %v1106 = vpop.permute.xlu0 %1105
        %1108 = vset.pattern.permute.xlu0 2
        %1109 = vperm.xlu0 %1108, %v989
        %v1110 = vpop.permute.xlu0 %1109
        %1112 = vset.pattern.permute.xlu0 2
        %1113 = vperm.xlu0 %1112, %v990
        %v1114 = vpop.permute.xlu0 %1113
        %1116 = vset.pattern.permute.xlu0 2
        %1117 = vperm.xlu0 %1116, %v991
        %v1118 = vpop.permute.xlu0 %1117
        %v1120 = vmul.f32 %v1090, %v593
        %v1121 = vmul.f32 %v1094, %v593
        %v1122 = vmul.f32 %v1098, %v593
        %v1123 = vmul.f32 %v1102, %v593
        %v1124 = vmul.f32 %v1106, %v593
        %v1125 = vmul.f32 %v1110, %v593
        %v1126 = vmul.f32 %v1114, %v593
        %v1127 = vmul.f32 %v1118, %v593
        %v1128 = vadd.f32 %v1080, %v1120
        %v1129 = vadd.f32 %v1081, %v1121
        %v1130 = vadd.f32 %v1082, %v1122
        %v1131 = vadd.f32 %v1083, %v1123
        %v1132 = vadd.f32 %v1084, %v1124
        %v1133 = vadd.f32 %v1085, %v1125
        %v1134 = vadd.f32 %v1086, %v1126
        %v1135 = vadd.f32 %v1087, %v1127
        %1136 = vset.pattern.permute.xlu0 3
        %1137 = vperm.xlu0 %1136, %v984
        %v1138 = vpop.permute.xlu0 %1137
        %1140 = vset.pattern.permute.xlu0 3
        %1141 = vperm.xlu0 %1140, %v985
        %v1142 = vpop.permute.xlu0 %1141
        %1144 = vset.pattern.permute.xlu0 3
        %1145 = vperm.xlu0 %1144, %v986
        %v1146 = vpop.permute.xlu0 %1145
        %1148 = vset.pattern.permute.xlu0 3
        %1149 = vperm.xlu0 %1148, %v987
        %v1150 = vpop.permute.xlu0 %1149
        %1152 = vset.pattern.permute.xlu0 3
        %1153 = vperm.xlu0 %1152, %v988
        %v1154 = vpop.permute.xlu0 %1153
        %1156 = vset.pattern.permute.xlu0 3
        %1157 = vperm.xlu0 %1156, %v989
        %v1158 = vpop.permute.xlu0 %1157
        %1160 = vset.pattern.permute.xlu0 3
        %1161 = vperm.xlu0 %1160, %v990
        %v1162 = vpop.permute.xlu0 %1161
        %1164 = vset.pattern.permute.xlu0 3
        %1165 = vperm.xlu0 %1164, %v991
        %v1166 = vpop.permute.xlu0 %1165
        %v1168 = vmul.f32 %v1138, %v658
        %v1169 = vmul.f32 %v1142, %v658
        %v1170 = vmul.f32 %v1146, %v658
        %v1171 = vmul.f32 %v1150, %v658
        %v1172 = vmul.f32 %v1154, %v658
        %v1173 = vmul.f32 %v1158, %v658
        %v1174 = vmul.f32 %v1162, %v658
        %v1175 = vmul.f32 %v1166, %v658
        %v1176 = vadd.f32 %v1128, %v1168
        %v1177 = vadd.f32 %v1129, %v1169
        %v1178 = vadd.f32 %v1130, %v1170
        %v1179 = vadd.f32 %v1131, %v1171
        %v1180 = vadd.f32 %v1132, %v1172
        %v1181 = vadd.f32 %v1133, %v1173
        %v1182 = vadd.f32 %v1134, %v1174
        %v1183 = vadd.f32 %v1135, %v1175
        %v1184 = vadd.f32 %v1176, %v683
        %v1185 = vadd.f32 %v1177, %v683
        %v1186 = vadd.f32 %v1178, %v683
        %v1187 = vadd.f32 %v1179, %v683
        %v1188 = vadd.f32 %v1180, %v683
        %v1189 = vadd.f32 %v1181, %v683
        %v1190 = vadd.f32 %v1182, %v683
        %v1191 = vadd.f32 %v1183, %v683
        %vm1192 = vcmp.gt.f32.partialorder %v1184, 0.0
        %vm1193 = vcmp.gt.f32.partialorder %v1185, 0.0
        %vm1194 = vcmp.gt.f32.partialorder %v1186, 0.0
        %vm1195 = vcmp.gt.f32.partialorder %v1187, 0.0
        %vm1196 = vcmp.gt.f32.partialorder %v1188, 0.0
        %vm1197 = vcmp.gt.f32.partialorder %v1189, 0.0
        %vm1198 = vcmp.gt.f32.partialorder %v1190, 0.0
        %vm1199 = vcmp.gt.f32.partialorder %v1191, 0.0
        %v1200 = vmul.f32 %v1184, %v709
        %v1201 = vmul.f32 %v1185, %v709
        %v1202 = vmul.f32 %v1186, %v709
        %v1203 = vmul.f32 %v1187, %v709
        %v1204 = vmul.f32 %v1188, %v709
        %v1205 = vmul.f32 %v1189, %v709
        %v1206 = vmul.f32 %v1190, %v709
        %v1207 = vmul.f32 %v1191, %v709
        %v1208 = vsel %vm1192, %v1184, %v1200
        %v1209 = vsel %vm1193, %v1185, %v1201
        %v1210 = vsel %vm1194, %v1186, %v1202
        %v1211 = vsel %vm1195, %v1187, %v1203
        %v1212 = vsel %vm1196, %v1188, %v1204
        %v1213 = vsel %vm1197, %v1189, %v1205
        %v1214 = vsel %vm1198, %v1190, %v1206
        %v1215 = vsel %vm1199, %v1191, %v1207
        %s1216 = scalar_lea.vmem %s405, 160
        %v1217 = vld [vmem:[%s1216] sm:$0xff]
        %v1218 = vld [vmem:[%s1216 + $0x8] sm:$0x1]
        %v1219 = vld [vmem:[%s1216 + $0x10] sm:$0xff]
        %v1220 = vld [vmem:[%s1216 + $0x18] sm:$0x1]
        %v1221 = vld [vmem:[%s1216 + $0x20] sm:$0xff]
        %v1222 = vld [vmem:[%s1216 + $0x28] sm:$0x1]
        %v1223 = vld [vmem:[%s1216 + $0x30] sm:$0xff]
        %v1224 = vld [vmem:[%s1216 + $0x38] sm:$0x1]
        %1226 = vset.pattern.permute.xlu0 0
        %1227 = vperm.xlu0 %1226, %v1217
        %v1228 = vpop.permute.xlu0 %1227
        %1231 = vset.pattern.permute.xlu0 0
        %1232 = vperm.xlu0 %1231, %v1218
        %v1233 = vpop.permute.xlu0 %1232
        %1236 = vset.pattern.permute.xlu0 0
        %1237 = vperm.xlu0 %1236, %v1219
        %v1238 = vpop.permute.xlu0 %1237
        %1241 = vset.pattern.permute.xlu0 0
        %1242 = vperm.xlu0 %1241, %v1220
        %v1243 = vpop.permute.xlu0 %1242
        %1246 = vset.pattern.permute.xlu0 0
        %1247 = vperm.xlu0 %1246, %v1221
        %v1248 = vpop.permute.xlu0 %1247
        %1251 = vset.pattern.permute.xlu0 0
        %1252 = vperm.xlu0 %1251, %v1222
        %v1253 = vpop.permute.xlu0 %1252
        %1256 = vset.pattern.permute.xlu0 0
        %1257 = vperm.xlu0 %1256, %v1223
        %v1258 = vpop.permute.xlu0 %1257
        %1261 = vset.pattern.permute.xlu0 0
        %1262 = vperm.xlu0 %1261, %v1224
        %v1263 = vpop.permute.xlu0 %1262
        %v1265 = vmul.f32 %v1208, %v1228
        %v1266 = vmul.f32 %v1209, %v1233
        %v1267 = vmul.f32 %v1210, %v1238
        %v1268 = vmul.f32 %v1211, %v1243
        %v1269 = vmul.f32 %v1212, %v1248
        %v1270 = vmul.f32 %v1213, %v1253
        %v1271 = vmul.f32 %v1214, %v1258
        %v1272 = vmul.f32 %v1215, %v1263
        %s1273 = scalar_lea.vmem %s398, 240
        %v1274 = vld [vmem:[%s1273] sm:$0xff]
        %v1275 = vld [vmem:[%s1273 + $0x10] sm:$0xff]
        %v1276 = vld [vmem:[%s1273 + $0x20] sm:$0xff]
        %v1277 = vld [vmem:[%s1273 + $0x30] sm:$0xff]
        %1279 = vset.pattern.permute.xlu0 0
        %1280 = vperm.xlu0 %1279, %v1274
        %v1281 = vpop.permute.xlu0 %1280
        %1284 = vset.pattern.permute.xlu0 0
        %1285 = vperm.xlu0 %1284, %v1275
        %v1286 = vpop.permute.xlu0 %1285
        %1289 = vset.pattern.permute.xlu0 0
        %1290 = vperm.xlu0 %1289, %v1276
        %v1291 = vpop.permute.xlu0 %1290
        %1294 = vset.pattern.permute.xlu0 0
        %1295 = vperm.xlu0 %1294, %v1277
        %v1296 = vpop.permute.xlu0 %1295
        %v1298 = vmul.f32 %v1281, %v473
        %v1299 = vmul.f32 %v1286, %v473
        %v1300 = vmul.f32 %v1291, %v473
        %v1301 = vmul.f32 %v1296, %v473
        %1302 = vset.pattern.permute.xlu0 1
        %1303 = vperm.xlu0 %1302, %v1274
        %v1304 = vpop.permute.xlu0 %1303
        %1306 = vset.pattern.permute.xlu0 1
        %1307 = vperm.xlu0 %1306, %v1275
        %v1308 = vpop.permute.xlu0 %1307
        %1310 = vset.pattern.permute.xlu0 1
        %1311 = vperm.xlu0 %1310, %v1276
        %v1312 = vpop.permute.xlu0 %1311
        %1314 = vset.pattern.permute.xlu0 1
        %1315 = vperm.xlu0 %1314, %v1277
        %v1316 = vpop.permute.xlu0 %1315
        %v1318 = vmul.f32 %v1304, %v528
        %v1319 = vmul.f32 %v1308, %v528
        %v1320 = vmul.f32 %v1312, %v528
        %v1321 = vmul.f32 %v1316, %v528
        %v1322 = vadd.f32 %v1298, %v1318
        %v1323 = vadd.f32 %v1299, %v1319
        %v1324 = vadd.f32 %v1300, %v1320
        %v1325 = vadd.f32 %v1301, %v1321
        %1326 = vset.pattern.permute.xlu0 2
        %1327 = vperm.xlu0 %1326, %v1274
        %v1328 = vpop.permute.xlu0 %1327
        %1330 = vset.pattern.permute.xlu0 2
        %1331 = vperm.xlu0 %1330, %v1275
        %v1332 = vpop.permute.xlu0 %1331
        %1334 = vset.pattern.permute.xlu0 2
        %1335 = vperm.xlu0 %1334, %v1276
        %v1336 = vpop.permute.xlu0 %1335
        %1338 = vset.pattern.permute.xlu0 2
        %1339 = vperm.xlu0 %1338, %v1277
        %v1340 = vpop.permute.xlu0 %1339
        %v1342 = vmul.f32 %v1328, %v593
        %v1343 = vmul.f32 %v1332, %v593
        %v1344 = vmul.f32 %v1336, %v593
        %v1345 = vmul.f32 %v1340, %v593
        %v1346 = vadd.f32 %v1322, %v1342
        %v1347 = vadd.f32 %v1323, %v1343
        %v1348 = vadd.f32 %v1324, %v1344
        %v1349 = vadd.f32 %v1325, %v1345
        %1350 = vset.pattern.permute.xlu0 3
        %1351 = vperm.xlu0 %1350, %v1274
        %v1352 = vpop.permute.xlu0 %1351
        %1354 = vset.pattern.permute.xlu0 3
        %1355 = vperm.xlu0 %1354, %v1275
        %v1356 = vpop.permute.xlu0 %1355
        %1358 = vset.pattern.permute.xlu0 3
        %1359 = vperm.xlu0 %1358, %v1276
        %v1360 = vpop.permute.xlu0 %1359
        %1362 = vset.pattern.permute.xlu0 3
        %1363 = vperm.xlu0 %1362, %v1277
        %v1364 = vpop.permute.xlu0 %1363
        %v1366 = vmul.f32 %v1352, %v658
        %v1367 = vmul.f32 %v1356, %v658
        %v1368 = vmul.f32 %v1360, %v658
        %v1369 = vmul.f32 %v1364, %v658
        %v1370 = vadd.f32 %v1346, %v1366
        %v1371 = vadd.f32 %v1347, %v1367
        %v1372 = vadd.f32 %v1348, %v1368
        %v1373 = vadd.f32 %v1349, %v1369
        %v1374 = vadd.f32 %v1370, %v683
        %v1375 = vadd.f32 %v1371, %v683
        %v1376 = vadd.f32 %v1372, %v683
        %v1377 = vadd.f32 %v1373, %v683
        %vm1378 = vcmp.gt.f32.partialorder %v1374, 0.0
        %vm1379 = vcmp.gt.f32.partialorder %v1375, 0.0
        %vm1380 = vcmp.gt.f32.partialorder %v1376, 0.0
        %vm1381 = vcmp.gt.f32.partialorder %v1377, 0.0
        %v1382 = vmul.f32 %v1374, %v709
        %v1383 = vmul.f32 %v1375, %v709
        %v1384 = vmul.f32 %v1376, %v709
        %v1385 = vmul.f32 %v1377, %v709
        %v1386 = vsel %vm1378, %v1374, %v1382
        %v1387 = vsel %vm1379, %v1375, %v1383
        %v1388 = vsel %vm1380, %v1376, %v1384
        %v1389 = vsel %vm1381, %v1377, %v1385
        %s1390 = scalar_lea.vmem %s405, 240
        %v1391 = vld [vmem:[%s1390] sm:$0xff]
        %v1392 = vld [vmem:[%s1390 + $0x10] sm:$0xff]
        %v1393 = vld [vmem:[%s1390 + $0x20] sm:$0xff]
        %v1394 = vld [vmem:[%s1390 + $0x30] sm:$0xff]
        %1396 = vset.pattern.permute.xlu0 0
        %1397 = vperm.xlu0 %1396, %v1391
        %v1398 = vpop.permute.xlu0 %1397
        %1401 = vset.pattern.permute.xlu0 0
        %1402 = vperm.xlu0 %1401, %v1392
        %v1403 = vpop.permute.xlu0 %1402
        %1406 = vset.pattern.permute.xlu0 0
        %1407 = vperm.xlu0 %1406, %v1393
        %v1408 = vpop.permute.xlu0 %1407
        %1411 = vset.pattern.permute.xlu0 0
        %1412 = vperm.xlu0 %1411, %v1394
        %v1413 = vpop.permute.xlu0 %1412
        %v1415 = vmul.f32 %v1386, %v1398
        %v1416 = vmul.f32 %v1387, %v1403
        %v1417 = vmul.f32 %v1388, %v1408
        %v1418 = vmul.f32 %v1389, %v1413
        %v1419 = vld [vmem:[%s5] sm:$0x1]
        %v1420 = vlaneseq
        %v1421 = vshrl.u32 %v1420, 7
        %v1422 = vsub.s32 0, %v1421
        %v1423 = vrot.slane %v1419, %v1422
        %v1424 = vmul.f32 %v791, %v1423
        %v1425 = vmul.f32 %v793, %v1423
        %v1426 = vmul.f32 %v795, %v1423
        %v1427 = vmul.f32 %v797, %v1423
        %v1428 = vld [vmem:[%s5 + $0x1] sm:$0x1]
        %v1429 = vlaneseq
        %v1430 = vshrl.u32 %v1429, 7
        %v1431 = vsub.s32 0, %v1430
        %v1432 = vrot.slane %v1428, %v1431
        %v1433 = vmul.f32 %v978, %v1432
        %v1434 = vmul.f32 %v979, %v1432
        %v1435 = vmul.f32 %v980, %v1432
        %v1436 = vmul.f32 %v981, %v1432
        %v1437 = vadd.f32 %v1424, %v1433
        %v1438 = vadd.f32 %v1425, %v1434
        %v1439 = vadd.f32 %v1426, %v1435
        %v1440 = vadd.f32 %v1427, %v1436
        %v1441 = vld [vmem:[%s5 + $0x2] sm:$0x1]
        %v1442 = vlaneseq
        %v1443 = vshrl.u32 %v1442, 7
        %v1444 = vsub.s32 0, %v1443
        %v1445 = vrot.slane %v1441, %v1444
        %v1446 = vmul.f32 %v791, %v1445
        %v1447 = vmul.f32 %v792, %v1445
        %v1448 = vmul.f32 %v793, %v1445
        %v1449 = vmul.f32 %v794, %v1445
        %v1450 = vmul.f32 %v795, %v1445
        %v1451 = vmul.f32 %v796, %v1445
        %v1452 = vmul.f32 %v797, %v1445
        %v1453 = vmul.f32 %v798, %v1445
        %vm1462 = vcmask 1046528
        %v1463 = vrot.slane %v1446, 1
        %v1464 = vrot.slane %v1447, 1
        %v1465 = vsel %vm1462, %v1463, %v1464
        %v1466 = vrot.slane %v1448, 1
        %v1467 = vrot.slane %v1449, 1
        %v1468 = vsel %vm1462, %v1466, %v1467
        %v1469 = vrot.slane %v1450, 1
        %v1470 = vrot.slane %v1451, 1
        %v1471 = vsel %vm1462, %v1469, %v1470
        %v1472 = vrot.slane %v1452, 1
        %v1473 = vrot.slane %v1453, 1
        %v1474 = vsel %vm1462, %v1472, %v1473
        %v1479 = vadd.f32 %v1437, %v1465
        %v1480 = vadd.f32 %v1438, %v1468
        %v1481 = vadd.f32 %v1439, %v1471
        %v1482 = vadd.f32 %v1440, %v1474
        %v1483 = vld [vmem:[%s5 + $0x3] sm:$0x1]
        %v1484 = vlaneseq
        %v1485 = vshrl.u32 %v1484, 7
        %v1486 = vsub.s32 0, %v1485
        %v1487 = vrot.slane %v1483, %v1486
        %v1488 = vmul.f32 %v1265, %v1487
        %v1489 = vmul.f32 %v1267, %v1487
        %v1490 = vmul.f32 %v1269, %v1487
        %v1491 = vmul.f32 %v1271, %v1487
        %v1492 = vadd.f32 %v1479, %v1488
        %v1493 = vadd.f32 %v1480, %v1489
        %v1494 = vadd.f32 %v1481, %v1490
        %v1495 = vadd.f32 %v1482, %v1491
        %v1496 = vld [vmem:[%s5 + $0x4] sm:$0x1]
        %v1497 = vlaneseq
        %v1498 = vshrl.u32 %v1497, 7
        %v1499 = vsub.s32 0, %v1498
        %v1500 = vrot.slane %v1496, %v1499
        %v1501 = vmul.f32 %v1415, %v1500
        %v1502 = vmul.f32 %v1416, %v1500
        %v1503 = vmul.f32 %v1417, %v1500
        %v1504 = vmul.f32 %v1418, %v1500
        %v1505 = vadd.f32 %v1492, %v1501
        %v1506 = vadd.f32 %v1493, %v1502
        %v1507 = vadd.f32 %v1494, %v1503
        %v1508 = vadd.f32 %v1495, %v1504
        %v1509 = vld [vmem:[%s5 + $0x5] sm:$0x1]
        %v1510 = vlaneseq
        %v1511 = vshrl.u32 %v1510, 7
        %v1512 = vsub.s32 0, %v1511
        %v1513 = vrot.slane %v1509, %v1512
        %v1514 = vmul.f32 %v1265, %v1513
        %v1515 = vmul.f32 %v1266, %v1513
        %v1516 = vmul.f32 %v1267, %v1513
        %v1517 = vmul.f32 %v1268, %v1513
        %v1518 = vmul.f32 %v1269, %v1513
        %v1519 = vmul.f32 %v1270, %v1513
        %v1520 = vmul.f32 %v1271, %v1513
        %v1521 = vmul.f32 %v1272, %v1513
        %v1530 = vrot.slane %v1514, 1
        %v1531 = vrot.slane %v1515, 1
        %v1532 = vsel %vm1462, %v1530, %v1531
        %v1533 = vrot.slane %v1516, 1
        %v1534 = vrot.slane %v1517, 1
        %v1535 = vsel %vm1462, %v1533, %v1534
        %v1536 = vrot.slane %v1518, 1
        %v1537 = vrot.slane %v1519, 1
        %v1538 = vsel %vm1462, %v1536, %v1537
        %v1539 = vrot.slane %v1520, 1
        %v1540 = vrot.slane %v1521, 1
        %v1541 = vsel %vm1462, %v1539, %v1540
        %v1546 = vadd.f32 %v1505, %v1532
        %v1547 = vadd.f32 %v1506, %v1535
        %v1548 = vadd.f32 %v1507, %v1538
        %v1549 = vadd.f32 %v1508, %v1541
        %v1550 = vld [vmem:[%s5 + $0x6] sm:$0x1]
        %v1551 = vlaneseq
        %v1552 = vshrl.u32 %v1551, 7
        %v1553 = vsub.s32 0, %v1552
        %v1554 = vrot.slane %v1550, %v1553
        %v1555 = vmul.f32 %v793, %v1554
        %v1556 = vmul.f32 %v795, %v1554
        %v1557 = vmul.f32 %v797, %v1554
        %v1558 = vmul.f32 %v799, %v1554
        %v1559 = vadd.f32 %v1546, %v1555
        %v1560 = vadd.f32 %v1547, %v1556
        %v1561 = vadd.f32 %v1548, %v1557
        %v1562 = vadd.f32 %v1549, %v1558
        %v1563 = vld [vmem:[%s5 + $0x7] sm:$0x1]
        %v1564 = vlaneseq
        %v1565 = vshrl.u32 %v1564, 7
        %v1566 = vsub.s32 0, %v1565
        %v1567 = vrot.slane %v1563, %v1566
        %v1568 = vmul.f32 %v979, %v1567
        %v1569 = vmul.f32 %v980, %v1567
        %v1570 = vmul.f32 %v981, %v1567
        %v1571 = vmul.f32 %v982, %v1567
        %v1572 = vadd.f32 %v1559, %v1568
        %v1573 = vadd.f32 %v1560, %v1569
        %v1574 = vadd.f32 %v1561, %v1570
        %v1575 = vadd.f32 %v1562, %v1571
        %v1576 = vld [vmem:[%s5 + $0x8] sm:$0x1]
        %v1577 = vlaneseq
        %v1578 = vshrl.u32 %v1577, 7
        %v1579 = vsub.s32 0, %v1578
        %v1580 = vrot.slane %v1576, %v1579
        %v1581 = vmul.f32 %v793, %v1580
        %v1582 = vmul.f32 %v794, %v1580
        %v1583 = vmul.f32 %v795, %v1580
        %v1584 = vmul.f32 %v796, %v1580
        %v1585 = vmul.f32 %v797, %v1580
        %v1586 = vmul.f32 %v798, %v1580
        %v1587 = vmul.f32 %v799, %v1580
        %v1588 = vmul.f32 %v800, %v1580
        %v1597 = vrot.slane %v1581, 1
        %v1598 = vrot.slane %v1582, 1
        %v1599 = vsel %vm1462, %v1597, %v1598
        %v1600 = vrot.slane %v1583, 1
        %v1601 = vrot.slane %v1584, 1
        %v1602 = vsel %vm1462, %v1600, %v1601
        %v1603 = vrot.slane %v1585, 1
        %v1604 = vrot.slane %v1586, 1
        %v1605 = vsel %vm1462, %v1603, %v1604
        %v1606 = vrot.slane %v1587, 1
        %v1607 = vrot.slane %v1588, 1
        %v1608 = vsel %vm1462, %v1606, %v1607
        %v1613 = vadd.f32 %v1572, %v1599
        %v1614 = vadd.f32 %v1573, %v1602
        %v1615 = vadd.f32 %v1574, %v1605
        %v1616 = vadd.f32 %v1575, %v1608
        %v1617 = vld [vmem:[%s6] sm:$0x1]
        %v1619 = vlaneseq
        %v1620 = vshrl.u32 %v1619, 7
        %v1621 = vsub.s32 0, %v1620
        %v1622 = vrot.slane %v1617, %v1621
        %v1624 = vadd.f32 %v1613, %v1622
        %v1625 = vadd.f32 %v1614, %v1622
        %v1626 = vadd.f32 %v1615, %v1622
        %v1627 = vadd.f32 %v1616, %v1622
        %vm1628 = vcmp.gt.f32.partialorder %v1624, 0.0
        %vm1629 = vcmp.gt.f32.partialorder %v1625, 0.0
        %vm1630 = vcmp.gt.f32.partialorder %v1626, 0.0
        %vm1631 = vcmp.gt.f32.partialorder %v1627, 0.0
        %v1632 = vld [vmem:[%s7] sm:$0x1]
        %v1634 = vlaneseq
        %v1635 = vshrl.u32 %v1634, 7
        %v1636 = vsub.s32 0, %v1635
        %v1637 = vrot.slane %v1632, %v1636
        %v1639 = vmul.f32 %v1624, %v1637
        %v1640 = vmul.f32 %v1625, %v1637
        %v1641 = vmul.f32 %v1626, %v1637
        %v1642 = vmul.f32 %v1627, %v1637
        %v1643 = vsel %vm1628, %v1624, %v1639
        %v1644 = vsel %vm1629, %v1625, %v1640
        %v1645 = vsel %vm1630, %v1626, %v1641
        %v1646 = vsel %vm1631, %v1627, %v1642
        %v1647 = vld [vmem:[%s8] sm:$0xff]
        %v1648 = vld [vmem:[%s8 + $0x8] sm:$0xff]
        %v1649 = vld [vmem:[%s8 + $0x10] sm:$0xff]
        %v1650 = vld [vmem:[%s8 + $0x18] sm:$0xff]
        %v1651 = vld [vmem:[%s8 + $0x20] sm:$0xff]
        %v1652 = vld [vmem:[%s8 + $0x28] sm:$0xff]
        %v1653 = vld [vmem:[%s8 + $0x30] sm:$0xff]
        %v1654 = vld [vmem:[%s8 + $0x38] sm:$0xff]
        %v1655 = vld [vmem:[%s8 + $0x40] sm:$0xff]
        %v1656 = vld [vmem:[%s8 + $0x48] sm:$0xff]
        %v1657 = vld [vmem:[%s8 + $0x50] sm:$0xff]
        %v1658 = vld [vmem:[%s8 + $0x58] sm:$0xff]
        %v1659 = vld [vmem:[%s8 + $0x60] sm:$0xff]
        %v1660 = vld [vmem:[%s8 + $0x68] sm:$0xff]
        %v1661 = vld [vmem:[%s8 + $0x70] sm:$0xff]
        %v1662 = vld [vmem:[%s8 + $0x78] sm:$0xff]
        %v1663 = vld [vmem:[%s9] sm:$0x1]
        %v1665 = vlaneseq
        %v1666 = vshrl.u32 %v1665, 7
        %v1667 = vsub.s32 0, %v1666
        %v1668 = vrot.slane %v1663, %v1667
        %1670 = vmatprep.subr.mxu0 0.0
        %1671 = vmatpush1.msra.mxu0 %v1647
        %1672 = vmatprep.subr.mxu0 0.0
        %1673 = vmatpush1.msra.mxu0 %v1648
        %1674 = vmatprep.subr.mxu0 0.0
        %1675 = vmatpush1.msra.mxu0 %v1649
        %1676 = vmatprep.subr.mxu0 0.0
        %1677 = vmatpush1.msra.mxu0 %v1650
        %1678 = vmatprep.subr.mxu0 0.0
        %1679 = vmatpush1.msra.mxu0 %v1651
        %1680 = vmatprep.subr.mxu0 0.0
        %1681 = vmatpush1.msra.mxu0 %v1652
        %1682 = vmatprep.subr.mxu0 0.0
        %1683 = vmatpush1.msra.mxu0 %v1653
        %1684 = vmatprep.subr.mxu0 0.0
        %1685 = vmatpush1.msra.mxu0 %v1654
        %1686 = vmatprep.subr.mxu0 0.0
        %1687 = vmatpush1.msra.mxu0 %v1655
        %1688 = vmatprep.subr.mxu0 0.0
        %1689 = vmatpush1.msra.mxu0 %v1656
        %1690 = vmatprep.subr.mxu0 0.0
        %1691 = vmatpush1.msra.mxu0 %v1657
        %1692 = vmatprep.subr.mxu0 0.0
        %1693 = vmatpush1.msra.mxu0 %v1658
        %1694 = vmatprep.subr.mxu0 0.0
        %1695 = vmatpush1.msra.mxu0 %v1659
        %1696 = vmatprep.subr.mxu0 0.0
        %1697 = vmatpush1.msra.mxu0 %v1660
        %1698 = vmatprep.subr.mxu0 0.0
        %1699 = vmatpush1.msra.mxu0 %v1661
        %1700 = vmatprep.subr.mxu0 0.0
        %1701 = vmatpush1.msra.mxu0 %v1662
        %1702 = vmatprep.subr.mxu0 0.0
        %1703 = vmatpush1.msra.mxu0 0.0
        %1704 = vmatprep.subr.mxu0 0.0
        %1705 = vmatpush1.msra.mxu0 0.0
        %1706 = vmatprep.subr.mxu0 0.0
        %1707 = vmatpush1.msra.mxu0 0.0
        %1708 = vmatprep.subr.mxu0 0.0
        %1709 = vmatpush1.msra.mxu0 0.0
        %1710 = vmatprep.subr.mxu0 0.0
        %1711 = vmatpush1.msra.mxu0 0.0
        %1712 = vmatprep.subr.mxu0 0.0
        %1713 = vmatpush1.msra.mxu0 0.0
        %1714 = vmatprep.subr.mxu0 0.0
        %1715 = vmatpush1.msra.mxu0 0.0
        %1716 = vmatprep.subr.mxu0 0.0
        %1717 = vmatpush1.msra.mxu0 0.0
        %1718 = vmatprep.subr.mxu0 0.0
        %1719 = vmatpush1.msra.mxu0 0.0
        %1720 = vmatprep.subr.mxu0 0.0
        %1721 = vmatpush1.msra.mxu0 0.0
        %1722 = vmatprep.subr.mxu0 0.0
        %1723 = vmatpush1.msra.mxu0 0.0
        %1724 = vmatprep.subr.mxu0 0.0
        %1725 = vmatpush1.msra.mxu0 0.0
        %1726 = vmatprep.subr.mxu0 0.0
        %1727 = vmatpush1.msra.mxu0 0.0
        %1728 = vmatprep.subr.mxu0 0.0
        %1729 = vmatpush1.msra.mxu0 0.0
        %1730 = vmatprep.subr.mxu0 0.0
        %1731 = vmatpush1.msra.mxu0 0.0
        %1732 = vmatprep.subr.mxu0 0.0
        %1733 = vmatpush1.msra.mxu0 0.0
        %1734 = vmatprep.mubr.f32.mxu0 0.0
        %1735 = vmatmul.mubr.f32.gmra.mrb[0].mxu0 %v1643
        %v1736 = vpop.f32.mrb[0].mxu0
        %v1737 = vadd.f32 %v1668, %v1736
        %v1738 = vpop.f32.mrb[0].mxu0
        %1739 = vmatprep.mubr.f32.mxu0 0.0
        %1740 = vmatmul.mubr.f32.gmra.mrb[0].mxu0 %v1644
        %v1741 = vpop.f32.mrb[0].mxu0
        %v1742 = vadd.f32 %v1668, %v1741
        %v1743 = vpop.f32.mrb[0].mxu0
        %1744 = vmatprep.mubr.f32.mxu0 0.0
        %1745 = vmatmul.mubr.f32.gmra.mrb[0].mxu0 %v1645
        %v1746 = vpop.f32.mrb[0].mxu0
        %v1747 = vadd.f32 %v1668, %v1746
        %v1748 = vpop.f32.mrb[0].mxu0
        %1749 = vmatprep.mubr.f32.mxu0 0.0
        %1750 = vmatmul.mubr.f32.gmra.mrb[0].mxu0 %v1646
        %v1751 = vpop.f32.mrb[0].mxu0
        %v1752 = vadd.f32 %v1668, %v1751
        %v1753 = vpop.f32.mrb[0].mxu0
        %1754 = vdwg.mxu0
        %1755 = vst [vmem:[%s391] sm:$0xff] %v1737
        %1756 = vst [vmem:[%s391 + $0x8] sm:$0xff] %v1742
        %1757 = vst [vmem:[%s391 + $0x10] sm:$0xff] %v1747
        %1758 = vst [vmem:[%s391 + $0x18] sm:$0xff] %v1752
        %s1759 = sand.u32 %s270, 1
        %s1760 = scalar_lea.sflag [#allocation3], %s1759
        %s1761 = sand.u32 %s270, 1
        %s1762 = smul.addr %s1761, 32
        %s1763 = scalar_lea.vmem [#allocation2], %s1762
        // Predicated region
        $region61: #{tpu_custom_call.1} parent=59 // pred_check
          %p1764 = pneg %p280
        $region62: #{tpu_custom_call.1} parent=59 // pred_check_branch
          %1766 = sbr.rel (%p1764) target = $region64
        $region63: #{tpu_custom_call.1} parent=59 // pred_region
          %s1767 = smul.u32 4, %s29
          %s1769 = ssub.s32 512, 512
          %1770 = vsyncadd %s1760, %s1769
          %s1771 = smul.addr %s28, 8
          %s1772 = sadd.s32 %s1767, %s1771
          %s1773 = smul.addr %s1772, 128
          %s1774 = scalar_lea.hbm %s10, %s1773
          %s1775 = sshll.u32 %s1763, 4
          %s1776 = int_to_ptr.vmem [resolvable:$true] %s1775
          %1781 = dma.vmem_to_hbm [thread:$0]  %s1776, 512, %s1774, %s1760, 128, 128, 8
        $region64: #{tpu_custom_call.1} parent=59 // pred_fallthru
          _
      $region60: #{tpu_custom_call.1} parent=5 // pred_fallthru
        _
      %p1782 = scmp.le.s32.totalorder 2, %s19
      // Predicated region
      $region65: #{tpu_custom_call.1} parent=5 // pred_check
        %p1783 = pneg %p1782
      $region66: #{tpu_custom_call.1} parent=5 // pred_check_branch
        %1785 = sbr.rel (%p1783) target = $region68
      $region67: #{tpu_custom_call.1} parent=5 // pred_region
        %s1786 = ssub.s32 %s19, 2
        // Predicated region
        $region69: #{tpu_custom_call.1} parent=67 // pred_check
          %p1787 = pneg %p286
        $region70: #{tpu_custom_call.1} parent=67 // pred_check_branch
          %1789 = sbr.rel (%p1787) target = $region72
        $region71: #{tpu_custom_call.1} parent=67 // pred_region
          %s1790 = sand.u32 %s271, 1
          %s1791 = scalar_lea.sflag [#allocation3], %s1790
          %s1792 = sand.u32 %s271, 1
          %s1793 = smul.addr %s1792, 32
          %s1794 = scalar_lea.vmem [#allocation2], %s1793
          %1795 = dma.done %s1791, 512
        $region72: #{tpu_custom_call.1} parent=67 // pred_fallthru
          _
      $region68: #{tpu_custom_call.1} parent=5 // pred_fallthru
        _
    $region6: #{tpu_custom_call.1} parent=1 // loop_footer
      %s23 = sadd.s32 1, %s19
    $region7: #{tpu_custom_call.1} parent=1 // loop_footer_branch
      %18 = sbr.rel target = $region3
    $region8: #{tpu_custom_call.1} parent=1 // loop_exit
      _
    %1796 = vsyncpa [#allocation3], 1
    %s1797 = scalar_lea.sflag [#allocation3], 1
    %1798 = vsyncpa %s1797, 1

</llo_original>
